<compile_context>
chip_gen: v7x
topology: tpu7x:2x2x1
jax: 0.10.0
libtpu: 0.0.40
codegen_flags: <defaults>
</compile_context>

<pallas_src>
import functools

import jax
import jax.numpy as jnp
from jax.experimental import pallas as pl
from jax.experimental.pallas import tpu as pltpu


def _round_up(x, m):
    return ((x + m - 1) // m) * m


def _mlp_kernel(x_ref, w1_ref, b1_ref, w2_ref, b2_ref, w3_ref, b3_ref,
                w4_ref, b4_ref, o_ref, acc_ref):
    """Fused 4-layer MLP on one (batch_tile) x (k_tile) block.

    Grid = (batch_tiles, k_tiles).  fc1 is accumulated over the K axis into an
    f32 VMEM scratch; fc2..fc4 and the (lane-dense, 128-padded) store happen
    only on the last K step.  All dots are bf16 x bf16 -> f32 on the MXU.
    """
    k = pl.program_id(1)
    nk = pl.num_programs(1)

    @pl.when(k == 0)
    def _():
        acc_ref[...] = jnp.zeros_like(acc_ref)

    # Partial fc1: (bt, tk) @ (tk, n1), f32 accumulation.
    acc_ref[...] += jnp.dot(x_ref[...], w1_ref[...],
                            preferred_element_type=jnp.float32)

    @pl.when(k == nk - 1)
    def _():
        h = jnp.maximum(acc_ref[...] + b1_ref[...], 0.0)
        h = jnp.maximum(
            jnp.dot(h.astype(jnp.bfloat16), w2_ref[...],
                    preferred_element_type=jnp.float32) + b2_ref[...], 0.0)
        h = jnp.maximum(
            jnp.dot(h.astype(jnp.bfloat16), w3_ref[...],
                    preferred_element_type=jnp.float32) + b3_ref[...], 0.0)
        o_ref[...] = (jnp.dot(h.astype(jnp.bfloat16), w4_ref[...],
                              preferred_element_type=jnp.float32)
                      + b4_ref[...])


@functools.partial(jax.jit, static_argnames=("batch_tile_cap", "k_tile"))
def neuralnet_forward(x, params, *, batch_tile_cap=256, k_tile=2048):
    """Runs the fused, K-tiled MLP Pallas kernel.  x: (N, C, H, W) float32."""
    w1, b1, w2, b2, w3, b3, w4, b4 = params
    N = x.shape[0]
    d_in, n1 = w1.shape
    n2 = w2.shape[1]
    n3 = w3.shape[1]
    out_dim = w4.shape[1]

    # --- Tiling choices -----------------------------------------------------
    # Batch tile: multiple of 128, clamped near N so tiny batches don't burn
    # MXU work on padding; cap keeps the activation tile VMEM-friendly.
    bt = _round_up(min(_round_up(batch_tile_cap, 128), _round_up(N, 128)), 128)
    n_pad = _round_up(N, bt)

    # K tile (fc1 reduction): multiple of 128, capped at the (padded) d_in.
    tk = min(_round_up(k_tile, 128), _round_up(d_in, 128))
    d_pad = _round_up(d_in, tk)
    nk = d_pad // tk

    # Lane-dense final layer: pad fc4 output columns up to a multiple of 128.
    out_pad = _round_up(max(out_dim, 128), 128)

    # --- Operand prep (bf16 weights/activations, f32 biases) ----------------
    xf = x.reshape(N, -1).astype(jnp.float32)        # torch.flatten(x, 1)
    xp = jnp.pad(xf, ((0, n_pad - N), (0, d_pad - d_in))).astype(jnp.bfloat16)

    w1p = jnp.pad(w1, ((0, d_pad - d_in), (0, 0))).astype(jnp.bfloat16)
    w2p = w2.astype(jnp.bfloat16)
    w3p = w3.astype(jnp.bfloat16)
    w4p = jnp.pad(w4, ((0, 0), (0, out_pad - out_dim))).astype(jnp.bfloat16)
    b1p = b1.astype(jnp.float32)
    b2p = b2.astype(jnp.float32)
    b3p = b3.astype(jnp.float32)
    b4p = jnp.pad(b4, ((0, 0), (0, out_pad - out_dim))).astype(jnp.float32)

    # --- VMEM budget (double-buffered inputs/outputs + f32 accumulator) -----
    vmem_est = (
        2 * bt * tk * 2                      # x tile (bf16, 2 buffers)
        + 2 * tk * n1 * 2                    # w1 tile (bf16, 2 buffers)
        + 2 * (n1 * n2 + n2 * n3 + n3 * out_pad) * 2   # resident small weights
        + 2 * bt * out_pad * 4               # output tile (f32, 2 buffers)
        + bt * n1 * 4                        # fc1 accumulator scratch
        + 2 * (n1 + n2 + n3 + out_pad) * 4   # biases
    )
    vmem_limit = min(max(2 * vmem_est, 32 * 1024 * 1024), 56 * 1024 * 1024)

    # --- Specs ---------------------------------------------------------------
    # Small weights/biases use a constant index_map -> DMA'd once, resident.
    def const_spec(a):
        return pl.BlockSpec(a.shape, lambda i, k: (0,) * a.ndim)

    grid = (n_pad // bt, nk)

    out = pl.pallas_call(
        _mlp_kernel,
        out_shape=jax.ShapeDtypeStruct((n_pad, out_pad), jnp.float32),
        grid=grid,
        in_specs=[
            pl.BlockSpec((bt, tk), lambda i, k: (i, k)),     # x
            pl.BlockSpec((tk, n1), lambda i, k: (k, 0)),     # w1 (K-tiled)
            const_spec(b1p),
            const_spec(w2p), const_spec(b2p),
            const_spec(w3p), const_spec(b3p),
            const_spec(w4p), const_spec(b4p),
        ],
        out_specs=pl.BlockSpec((bt, out_pad), lambda i, k: (i, 0)),
        scratch_shapes=[pltpu.VMEM((bt, n1), jnp.float32)],
        compiler_params=pltpu.CompilerParams(
            dimension_semantics=("parallel", "arbitrary"),
            vmem_limit_bytes=int(vmem_limit)),
    )(xp, w1p, b1p, w2p, b2p, w3p, b3p, w4p, b4p)

    return out[:N, :out_dim]


def init_params(key, d_in, n1, n2, n3, out_channels):
    """Deterministic PyTorch-style init: U(-1/sqrt(fan_in), 1/sqrt(fan_in))."""
    dims = [(d_in, n1), (n1, n2), (n2, n3), (n3, out_channels)]
    params = []
    for (fan_in, fan_out) in dims:
        key, kw, kb = jax.random.split(key, 3)
        bound = 1.0 / (fan_in ** 0.5)
        w = jax.random.uniform(kw, (fan_in, fan_out), jnp.float32,
                               minval=-bound, maxval=bound)
        b = jax.random.uniform(kb, (1, fan_out), jnp.float32,
                               minval=-bound, maxval=bound)
        params += [w, b]
    return tuple(params)


def reference_forward(x, params):
    """Pure-JAX f32 reference for correctness checking."""
    w1, b1, w2, b2, w3, b3, w4, b4 = params
    h = x.reshape(x.shape[0], -1)
    h = jnp.maximum(h @ w1 + b1, 0.0)
    h = jnp.maximum(h @ w2 + b2, 0.0)
    h = jnp.maximum(h @ w3 + b3, 0.0)
    return h @ w4 + b4


if __name__ == "__main__":
    # Small shapes consistent with the module (NCHW input, flattened):
    #   x: (batch=2, C=8, H=8, W=8) -> 512 input features
    #   n1=256, n2=128, n3=128, out_channels=8, activation=ReLU
    key = jax.random.PRNGKey(0)
    kx, kp = jax.random.split(key)

    N, C, H, W = 2, 8, 8, 8
    d_in = C * H * W
    n1, n2, n3, out_channels = 256, 128, 128, 8

    x = jax.random.normal(kx, (N, C, H, W), jnp.float32)
    params = init_params(kp, d_in, n1, n2, n3, out_channels)

    # k_tile=128 -> 4 reduction steps over the 512 input features, exercising
    # the same fc1 accumulation path used at full (64*64*64) scale.
    out = neuralnet_forward(x, params, batch_tile_cap=256, k_tile=128)
    out = jax.block_until_ready(out)

    ref = reference_forward(x, params)
    assert out.shape == (N, out_channels), out.shape
    max_err = float(jnp.max(jnp.abs(out - ref)))
    # bf16 MXU inputs with f32 accumulation -> loosened tolerance vs f32 ref.
    assert jnp.allclose(out, ref, atol=5e-2, rtol=5e-2), max_err

    print("KERNEL_OK")
</pallas_src>

<mosaic_0001>
module attributes {stable_mosaic.version = 11 : i64} {
  func.func @_mlp_kernel(%arg0: i32, %arg1: i32, %arg2: memref<128x128xbf16, #tpu.memory_space<vmem>>, %arg3: memref<128x256xbf16, #tpu.memory_space<vmem>>, %arg4: memref<1x256xf32, #tpu.memory_space<vmem>>, %arg5: memref<256x128xbf16, #tpu.memory_space<vmem>>, %arg6: memref<1x128xf32, #tpu.memory_space<vmem>>, %arg7: memref<128x128xbf16, #tpu.memory_space<vmem>>, %arg8: memref<1x128xf32, #tpu.memory_space<vmem>>, %arg9: memref<128x128xbf16, #tpu.memory_space<vmem>>, %arg10: memref<1x128xf32, #tpu.memory_space<vmem>>, %arg11: memref<128x128xf32, #tpu.memory_space<vmem>>, %arg12: memref<128x256xf32, #tpu.memory_space<vmem>>) attributes {dimension_semantics = [#tpu.dimension_semantics<parallel>, #tpu.dimension_semantics<arbitrary>], iteration_bounds = array<i64: 1, 4>, scalar_prefetch = 0 : i64, scratch_operands = 1 : i64, tpu.core_type = #tpu.core_type<tc>, window_params = [{transform_indices = @transform_0, window_bounds = array<i64: 128, 128>}, {transform_indices = @transform_1, window_bounds = array<i64: 128, 256>}, {pipeline_mode = #tpu.pipeline_mode<synchronous>, transform_indices = @transform_2, window_bounds = array<i64: 1, 256>}, {pipeline_mode = #tpu.pipeline_mode<synchronous>, transform_indices = @transform_3, window_bounds = array<i64: 256, 128>}, {pipeline_mode = #tpu.pipeline_mode<synchronous>, transform_indices = @transform_4, window_bounds = array<i64: 1, 128>}, {pipeline_mode = #tpu.pipeline_mode<synchronous>, transform_indices = @transform_5, window_bounds = array<i64: 128, 128>}, {pipeline_mode = #tpu.pipeline_mode<synchronous>, transform_indices = @transform_6, window_bounds = array<i64: 1, 128>}, {pipeline_mode = #tpu.pipeline_mode<synchronous>, transform_indices = @transform_7, window_bounds = array<i64: 128, 128>}, {pipeline_mode = #tpu.pipeline_mode<synchronous>, transform_indices = @transform_8, window_bounds = array<i64: 1, 128>}, {transform_indices = @transform_9, window_bounds = array<i64: 128, 128>}]} {
    %c0_i32 = arith.constant 0 : i32
    %0 = arith.cmpi eq, %arg1, %c0_i32 : i32
    %1 = arith.extui %0 : i1 to i32
    %c0_i32_0 = arith.constant 0 : i32
    %2 = arith.cmpi ne, %1, %c0_i32_0 : i32
    scf.if %2 {
      %cst_9 = arith.constant 0.000000e+00 : f32
      %12 = vector.broadcast %cst_9 : f32 to vector<128x256xf32>
      %c0_10 = arith.constant 0 : index
      %c0_11 = arith.constant 0 : index
      %13 = vector.load %arg12[%c0_10, %c0_11] : memref<128x256xf32, #tpu.memory_space<vmem>>, vector<128x256xf32>
      tpu.vector_store %arg12[%c0_10, %c0_11], %12 {strides = array<i32>} : memref<128x256xf32, #tpu.memory_space<vmem>>, vector<128x256xf32>,
    } else {
    }
    %c0 = arith.constant 0 : index
    %c0_1 = arith.constant 0 : index
    %3 = vector.load %arg12[%c0, %c0_1] : memref<128x256xf32, #tpu.memory_space<vmem>>, vector<128x256xf32>
    %c0_2 = arith.constant 0 : index
    %c0_3 = arith.constant 0 : index
    %4 = vector.load %arg2[%c0_2, %c0_3] : memref<128x128xbf16, #tpu.memory_space<vmem>>, vector<128x128xbf16>
    %c0_4 = arith.constant 0 : index
    %c0_5 = arith.constant 0 : index
    %5 = vector.load %arg3[%c0_4, %c0_5] : memref<128x256xbf16, #tpu.memory_space<vmem>>, vector<128x256xbf16>
    %cst = arith.constant dense<0.000000e+00> : vector<128x256xf32>
    %6 = tpu.matmul %4, %5, %cst {dimension_numbers = #tpu.dot_dimension_numbers<[1], [0], [0], [1], [0, 0, 1, 1], [], []>} : vector<128x128xbf16>, vector<128x256xbf16>, vector<128x256xf32> -> vector<128x256xf32>
    %7 = arith.addf %3, %6 : vector<128x256xf32>
    %c0_6 = arith.constant 0 : index
    %c0_7 = arith.constant 0 : index
    %8 = vector.load %arg12[%c0_6, %c0_7] : memref<128x256xf32, #tpu.memory_space<vmem>>, vector<128x256xf32>
    tpu.vector_store %arg12[%c0_6, %c0_7], %7 {strides = array<i32>} : memref<128x256xf32, #tpu.memory_space<vmem>>, vector<128x256xf32>,
    %c3_i32 = arith.constant 3 : i32
    %9 = arith.cmpi eq, %arg1, %c3_i32 : i32
    %10 = arith.extui %9 : i1 to i32
    %c0_i32_8 = arith.constant 0 : i32
    %11 = arith.cmpi ne, %10, %c0_i32_8 : i32
    scf.if %11 {
      %c0_9 = arith.constant 0 : index
      %c0_10 = arith.constant 0 : index
      %12 = vector.load %arg12[%c0_9, %c0_10] : memref<128x256xf32, #tpu.memory_space<vmem>>, vector<128x256xf32>
      %c0_11 = arith.constant 0 : index
      %c0_12 = arith.constant 0 : index
      %13 = vector.load %arg4[%c0_11, %c0_12] : memref<1x256xf32, #tpu.memory_space<vmem>>, vector<1x256xf32>
      %14 = vector.broadcast %13 : vector<1x256xf32> to vector<128x256xf32>
      %15 = arith.addf %12, %14 : vector<128x256xf32>
      %cst_13 = arith.constant 0.000000e+00 : f32
      %16 = vector.broadcast %cst_13 : f32 to vector<128x256xf32>
      %17 = arith.maximumf %15, %16 : vector<128x256xf32>
      %18 = arith.truncf %17 : vector<128x256xf32> to vector<128x256xbf16>
      %c0_14 = arith.constant 0 : index
      %c0_15 = arith.constant 0 : index
      %19 = vector.load %arg5[%c0_14, %c0_15] : memref<256x128xbf16, #tpu.memory_space<vmem>>, vector<256x128xbf16>
      %cst_16 = arith.constant dense<0.000000e+00> : vector<128x128xf32>
      %20 = tpu.matmul %18, %19, %cst_16 {dimension_numbers = #tpu.dot_dimension_numbers<[1], [0], [0], [1], [0, 0, 1, 1], [], []>} : vector<128x256xbf16>, vector<256x128xbf16>, vector<128x128xf32> -> vector<128x128xf32>
      %c0_17 = arith.constant 0 : index
      %c0_18 = arith.constant 0 : index
      %21 = vector.load %arg6[%c0_17, %c0_18] : memref<1x128xf32, #tpu.memory_space<vmem>>, vector<1x128xf32>
      %22 = vector.broadcast %21 : vector<1x128xf32> to vector<128x128xf32>
      %23 = arith.addf %20, %22 : vector<128x128xf32>
      %cst_19 = arith.constant 0.000000e+00 : f32
      %24 = vector.broadcast %cst_19 : f32 to vector<128x128xf32>
      %25 = arith.maximumf %23, %24 : vector<128x128xf32>
      %26 = arith.truncf %25 : vector<128x128xf32> to vector<128x128xbf16>
      %c0_20 = arith.constant 0 : index
      %c0_21 = arith.constant 0 : index
      %27 = vector.load %arg7[%c0_20, %c0_21] : memref<128x128xbf16, #tpu.memory_space<vmem>>, vector<128x128xbf16>
      %cst_22 = arith.constant dense<0.000000e+00> : vector<128x128xf32>
      %28 = tpu.matmul %26, %27, %cst_22 {dimension_numbers = #tpu.dot_dimension_numbers<[1], [0], [0], [1], [0, 0, 1, 1], [], []>} : vector<128x128xbf16>, vector<128x128xbf16>, vector<128x128xf32> -> vector<128x128xf32>
      %c0_23 = arith.constant 0 : index
      %c0_24 = arith.constant 0 : index
      %29 = vector.load %arg8[%c0_23, %c0_24] : memref<1x128xf32, #tpu.memory_space<vmem>>, vector<1x128xf32>
      %30 = vector.broadcast %29 : vector<1x128xf32> to vector<128x128xf32>
      %31 = arith.addf %28, %30 : vector<128x128xf32>
      %cst_25 = arith.constant 0.000000e+00 : f32
      %32 = vector.broadcast %cst_25 : f32 to vector<128x128xf32>
      %33 = arith.maximumf %31, %32 : vector<128x128xf32>
      %34 = arith.truncf %33 : vector<128x128xf32> to vector<128x128xbf16>
      %c0_26 = arith.constant 0 : index
      %c0_27 = arith.constant 0 : index
      %35 = vector.load %arg9[%c0_26, %c0_27] : memref<128x128xbf16, #tpu.memory_space<vmem>>, vector<128x128xbf16>
      %cst_28 = arith.constant dense<0.000000e+00> : vector<128x128xf32>
      %36 = tpu.matmul %34, %35, %cst_28 {dimension_numbers = #tpu.dot_dimension_numbers<[1], [0], [0], [1], [0, 0, 1, 1], [], []>} : vector<128x128xbf16>, vector<128x128xbf16>, vector<128x128xf32> -> vector<128x128xf32>
      %c0_29 = arith.constant 0 : index
      %c0_30 = arith.constant 0 : index
      %37 = vector.load %arg10[%c0_29, %c0_30] : memref<1x128xf32, #tpu.memory_space<vmem>>, vector<1x128xf32>
      %38 = vector.broadcast %37 : vector<1x128xf32> to vector<128x128xf32>
      %39 = arith.addf %36, %38 : vector<128x128xf32>
      %c0_31 = arith.constant 0 : index
      %c0_32 = arith.constant 0 : index
      %40 = vector.load %arg11[%c0_31, %c0_32] : memref<128x128xf32, #tpu.memory_space<vmem>>, vector<128x128xf32>
      tpu.vector_store %arg11[%c0_31, %c0_32], %39 {strides = array<i32>} : memref<128x128xf32, #tpu.memory_space<vmem>>, vector<128x128xf32>,
    } else {
    }
    return
  }
  func.func @transform_0(%arg0: i32, %arg1: i32) -> (i32, i32) {
    %c0_i32 = arith.constant 0 : i32
    return %arg0, %arg1 : i32, i32
  }
  func.func @transform_1(%arg0: i32, %arg1: i32) -> (i32, i32) {
    %c0_i32 = arith.constant 0 : i32
    %c0_i32_0 = arith.constant 0 : i32
    return %arg1, %c0_i32 : i32, i32
  }
  func.func @transform_2(%arg0: i32, %arg1: i32) -> (i32, i32) {
    %c0_i32 = arith.constant 0 : i32
    %c0_i32_0 = arith.constant 0 : i32
    %c0_i32_1 = arith.constant 0 : i32
    return %c0_i32, %c0_i32_0 : i32, i32
  }
  func.func @transform_3(%arg0: i32, %arg1: i32) -> (i32, i32) {
    %c0_i32 = arith.constant 0 : i32
    %c0_i32_0 = arith.constant 0 : i32
    %c0_i32_1 = arith.constant 0 : i32
    return %c0_i32, %c0_i32_0 : i32, i32
  }
  func.func @transform_4(%arg0: i32, %arg1: i32) -> (i32, i32) {
    %c0_i32 = arith.constant 0 : i32
    %c0_i32_0 = arith.constant 0 : i32
    %c0_i32_1 = arith.constant 0 : i32
    return %c0_i32, %c0_i32_0 : i32, i32
  }
  func.func @transform_5(%arg0: i32, %arg1: i32) -> (i32, i32) {
    %c0_i32 = arith.constant 0 : i32
    %c0_i32_0 = arith.constant 0 : i32
    %c0_i32_1 = arith.constant 0 : i32
    return %c0_i32, %c0_i32_0 : i32, i32
  }
  func.func @transform_6(%arg0: i32, %arg1: i32) -> (i32, i32) {
    %c0_i32 = arith.constant 0 : i32
    %c0_i32_0 = arith.constant 0 : i32
    %c0_i32_1 = arith.constant 0 : i32
    return %c0_i32, %c0_i32_0 : i32, i32
  }
  func.func @transform_7(%arg0: i32, %arg1: i32) -> (i32, i32) {
    %c0_i32 = arith.constant 0 : i32
    %c0_i32_0 = arith.constant 0 : i32
    %c0_i32_1 = arith.constant 0 : i32
    return %c0_i32, %c0_i32_0 : i32, i32
  }
  func.func @transform_8(%arg0: i32, %arg1: i32) -> (i32, i32) {
    %c0_i32 = arith.constant 0 : i32
    %c0_i32_0 = arith.constant 0 : i32
    %c0_i32_1 = arith.constant 0 : i32
    return %c0_i32, %c0_i32_0 : i32, i32
  }
  func.func @transform_9(%arg0: i32, %arg1: i32) -> (i32, i32) {
    %c0_i32 = arith.constant 0 : i32
    %c0_i32_0 = arith.constant 0 : i32
    return %arg0, %c0_i32 : i32, i32
  }
}

</mosaic_0001>

<llo_original>
// kernel: neuralnet_forward.1
$region0: #{neuralnet_forward.1}
  #allocation0 [shape = 'u32[]', space=smem, size = 0x4, offset = 0x4, fixed_abs, tag = 'smem constant byte address 0x4 - core index']
  #allocation1 [shape = 'u32[144,128]{1,0:T(1,128)}', space=vmem, size = 0x12000, scoped, tag = 'internal scratch']
  #allocation2 [shape = 'f32[128,256]{1,0:T(8,128)}', space=vmem, size = 0x20000, scoped, tag = 'scratch operand']
  %s0 = inlined_call_operand.vmem [shape: bf16[128,512], index: 0, kind: input, shape index: {}]
  %s1 = inlined_call_operand.vmem [shape: bf16[512,256], index: 1, kind: input, shape index: {}]
  %s2 = inlined_call_operand.vmem [shape: f32[1,256], index: 2, kind: input, shape index: {}]
  %s3 = inlined_call_operand.vmem [shape: bf16[256,128], index: 3, kind: input, shape index: {}]
  %s4 = inlined_call_operand.vmem [shape: f32[1,128], index: 4, kind: input, shape index: {}]
  %s5 = inlined_call_operand.vmem [shape: bf16[128,128], index: 5, kind: input, shape index: {}]
  %s6 = inlined_call_operand.vmem [shape: f32[1,128], index: 6, kind: input, shape index: {}]
  %s7 = inlined_call_operand.vmem [shape: bf16[128,128], index: 7, kind: input, shape index: {}]
  %s8 = inlined_call_operand.vmem [shape: f32[1,128], index: 8, kind: input, shape index: {}]
  %s9 = inlined_call_operand.vmem [shape: f32[128,128], index: 9, kind: output, shape index: {}]
  %s10 = sld [smem:[#allocation0]]
  $region118: #{neuralnet_forward.1} parent=0
    _
  %s12 = ssub.s32 1, %s10
  %s13 = scalar_select 0, %s12, %s10
  $region1: #{neuralnet_forward.1} parent=0
    #allocation3 [shape = 'u8[65536]{0}', space=vmem, size = 0x10000, scoped, tag = 'input window, operand 0']
    loop: start=0, step=1, limit=6
    $region2: #{neuralnet_forward.1} parent=1 // loop_pre_header
      _
    $region3: #{neuralnet_forward.1} parent=1 // loop_header
      %s15 = sphi 0, %s19
      %p16 = scmp.ge.s32.totalorder %s15, 6
      %s22 = sphi 0, %s34
      %s23 = sphi 0, %s30
      %s24 = sphi 0, %s22
      %s25 = sphi 0, %s23
      %s26 = sphi 0, %s24
      %s27 = sphi 0, %s25
      %s39 = sphi 0, %s41
      %s42 = sphi 0, %s39
      %s43 = sphi 0, %s42
      %s59 = sphi 0, %s43
      %s65 = sphi 0, %s67
      %s68 = sphi 0, %s65
      %s69 = sphi 0, %s68
      %s85 = sphi 0, %s69
      %s89 = sphi 0, %s89
      %s91 = sphi 0, %s89
      %s92 = sphi 0, %s91
      %s106 = sphi 0, %s92
      %s110 = sphi 0, %s110
      %s112 = sphi 0, %s110
      %s113 = sphi 0, %s112
      %s127 = sphi 0, %s113
      %s131 = sphi 0, %s131
      %s133 = sphi 0, %s131
      %s134 = sphi 0, %s133
      %s148 = sphi 0, %s134
      %s152 = sphi 0, %s152
      %s154 = sphi 0, %s152
      %s155 = sphi 0, %s154
      %s169 = sphi 0, %s155
      %s173 = sphi 0, %s173
      %s175 = sphi 0, %s173
      %s176 = sphi 0, %s175
      %s190 = sphi 0, %s176
      %s194 = sphi 0, %s194
      %s196 = sphi 0, %s194
      %s197 = sphi 0, %s196
      %s211 = sphi 0, %s197
      %s215 = sphi 0, %s215
      %s217 = sphi 0, %s215
      %s218 = sphi 0, %s217
      %s232 = sphi 0, %s218
      %s238 = sphi 0, %s240
      %s241 = sphi 0, %s238
      %s242 = sphi 0, %s241
      %s258 = sphi 0, %s242
    $region4: #{neuralnet_forward.1} parent=1 // loop_header_branch
      %18 = sbr.rel (%p16) target = $region8
    $region5: #{neuralnet_forward.1} parent=1 // loop_body
      %s20 = ssub.s32 %s15, 1
      %s21 = ssub.s32 %s15, 2
      %s28 = sadd.s32 1, %s23
      %p29 = scmp.ge.s32.totalorder %s28, 4
      %s30 = scalar_select %p29, 0, %s28
      %s31 = sadd.s32 1, %s22
      %s32 = scalar_select %p29, %s31, %s22
      %p33 = scmp.ge.s32.totalorder %s32, 1
      %s34 = scalar_select %p33, 0, %s32
      %s35 = ssub.s32 %s22, %s34
      %s36 = ssub.s32 %s23, %s30
      %s37 = sor.u32 %s35, %s36
      %p38 = scmp.eq.s32.totalorder %s37, 0
      %s40 = sadd.s32 %s39, 1
      %s41 = scalar_select %p38, %s39, %s40
      %p44 = pneg %p38
      %p45 = scmp.eq.s32.totalorder %s15, 3
      %p46 = por %p44, %p45
      %p47 = scmp.ne.s32.totalorder %s39, %s42
      %p48 = scmp.eq.s32.totalorder %s15, 0
      %p49 = por %p47, %p48
      %p50 = scmp.ne.s32.totalorder %s39, %s42
      %p51 = scmp.eq.s32.totalorder %s20, 3
      %p52 = por %p50, %p51
      %p53 = scmp.ne.s32.totalorder %s42, %s43
      %p54 = scmp.eq.s32.totalorder %s20, 0
      %p55 = por %p53, %p54
      %p56 = scmp.ne.s32.totalorder %s42, %s43
      %p57 = scmp.eq.s32.totalorder %s21, 3
      %p58 = por %p56, %p57
      %p60 = scmp.ne.s32.totalorder %s43, %s59
      %p61 = scmp.eq.s32.totalorder %s21, 0
      %p62 = por %p60, %p61
      %s63 = ssub.s32 %s23, %s30
      %p64 = scmp.eq.s32.totalorder %s63, 0
      %s66 = sadd.s32 %s65, 1
      %s67 = scalar_select %p64, %s65, %s66
      %p70 = pneg %p64
      %p71 = scmp.eq.s32.totalorder %s15, 3
      %p72 = por %p70, %p71
      %p73 = scmp.ne.s32.totalorder %s65, %s68
      %p74 = scmp.eq.s32.totalorder %s15, 0
      %p75 = por %p73, %p74
      %p76 = scmp.ne.s32.totalorder %s65, %s68
      %p77 = scmp.eq.s32.totalorder %s20, 3
      %p78 = por %p76, %p77
      %p79 = scmp.ne.s32.totalorder %s68, %s69
      %p80 = scmp.eq.s32.totalorder %s20, 0
      %p81 = por %p79, %p80
      %p82 = scmp.ne.s32.totalorder %s68, %s69
      %p83 = scmp.eq.s32.totalorder %s21, 3
      %p84 = por %p82, %p83
      %p86 = scmp.ne.s32.totalorder %s69, %s85
      %p87 = scmp.eq.s32.totalorder %s21, 0
      %p88 = por %p86, %p87
      %s90 = sadd.s32 %s89, 1
      %p93 = scmp.eq.s32.totalorder %s15, 3
      %p94 = scmp.ne.s32.totalorder %s89, %s91
      %p95 = scmp.eq.s32.totalorder %s15, 0
      %p96 = por %p94, %p95
      %p97 = scmp.ne.s32.totalorder %s89, %s91
      %p98 = scmp.eq.s32.totalorder %s20, 3
      %p99 = por %p97, %p98
      %p100 = scmp.ne.s32.totalorder %s91, %s92
      %p101 = scmp.eq.s32.totalorder %s20, 0
      %p102 = por %p100, %p101
      %p103 = scmp.ne.s32.totalorder %s91, %s92
      %p104 = scmp.eq.s32.totalorder %s21, 3
      %p105 = por %p103, %p104
      %p107 = scmp.ne.s32.totalorder %s92, %s106
      %p108 = scmp.eq.s32.totalorder %s21, 0
      %p109 = por %p107, %p108
      %s111 = sadd.s32 %s110, 1
      %p114 = scmp.eq.s32.totalorder %s15, 3
      %p115 = scmp.ne.s32.totalorder %s110, %s112
      %p116 = scmp.eq.s32.totalorder %s15, 0
      %p117 = por %p115, %p116
      %p118 = scmp.ne.s32.totalorder %s110, %s112
      %p119 = scmp.eq.s32.totalorder %s20, 3
      %p120 = por %p118, %p119
      %p121 = scmp.ne.s32.totalorder %s112, %s113
      %p122 = scmp.eq.s32.totalorder %s20, 0
      %p123 = por %p121, %p122
      %p124 = scmp.ne.s32.totalorder %s112, %s113
      %p125 = scmp.eq.s32.totalorder %s21, 3
      %p126 = por %p124, %p125
      %p128 = scmp.ne.s32.totalorder %s113, %s127
      %p129 = scmp.eq.s32.totalorder %s21, 0
      %p130 = por %p128, %p129
      %s132 = sadd.s32 %s131, 1
      %p135 = scmp.eq.s32.totalorder %s15, 3
      %p136 = scmp.ne.s32.totalorder %s131, %s133
      %p137 = scmp.eq.s32.totalorder %s15, 0
      %p138 = por %p136, %p137
      %p139 = scmp.ne.s32.totalorder %s131, %s133
      %p140 = scmp.eq.s32.totalorder %s20, 3
      %p141 = por %p139, %p140
      %p142 = scmp.ne.s32.totalorder %s133, %s134
      %p143 = scmp.eq.s32.totalorder %s20, 0
      %p144 = por %p142, %p143
      %p145 = scmp.ne.s32.totalorder %s133, %s134
      %p146 = scmp.eq.s32.totalorder %s21, 3
      %p147 = por %p145, %p146
      %p149 = scmp.ne.s32.totalorder %s134, %s148
      %p150 = scmp.eq.s32.totalorder %s21, 0
      %p151 = por %p149, %p150
      %s153 = sadd.s32 %s152, 1
      %p156 = scmp.eq.s32.totalorder %s15, 3
      %p157 = scmp.ne.s32.totalorder %s152, %s154
      %p158 = scmp.eq.s32.totalorder %s15, 0
      %p159 = por %p157, %p158
      %p160 = scmp.ne.s32.totalorder %s152, %s154
      %p161 = scmp.eq.s32.totalorder %s20, 3
      %p162 = por %p160, %p161
      %p163 = scmp.ne.s32.totalorder %s154, %s155
      %p164 = scmp.eq.s32.totalorder %s20, 0
      %p165 = por %p163, %p164
      %p166 = scmp.ne.s32.totalorder %s154, %s155
      %p167 = scmp.eq.s32.totalorder %s21, 3
      %p168 = por %p166, %p167
      %p170 = scmp.ne.s32.totalorder %s155, %s169
      %p171 = scmp.eq.s32.totalorder %s21, 0
      %p172 = por %p170, %p171
      %s174 = sadd.s32 %s173, 1
      %p177 = scmp.eq.s32.totalorder %s15, 3
      %p178 = scmp.ne.s32.totalorder %s173, %s175
      %p179 = scmp.eq.s32.totalorder %s15, 0
      %p180 = por %p178, %p179
      %p181 = scmp.ne.s32.totalorder %s173, %s175
      %p182 = scmp.eq.s32.totalorder %s20, 3
      %p183 = por %p181, %p182
      %p184 = scmp.ne.s32.totalorder %s175, %s176
      %p185 = scmp.eq.s32.totalorder %s20, 0
      %p186 = por %p184, %p185
      %p187 = scmp.ne.s32.totalorder %s175, %s176
      %p188 = scmp.eq.s32.totalorder %s21, 3
      %p189 = por %p187, %p188
      %p191 = scmp.ne.s32.totalorder %s176, %s190
      %p192 = scmp.eq.s32.totalorder %s21, 0
      %p193 = por %p191, %p192
      %s195 = sadd.s32 %s194, 1
      %p198 = scmp.eq.s32.totalorder %s15, 3
      %p199 = scmp.ne.s32.totalorder %s194, %s196
      %p200 = scmp.eq.s32.totalorder %s15, 0
      %p201 = por %p199, %p200
      %p202 = scmp.ne.s32.totalorder %s194, %s196
      %p203 = scmp.eq.s32.totalorder %s20, 3
      %p204 = por %p202, %p203
      %p205 = scmp.ne.s32.totalorder %s196, %s197
      %p206 = scmp.eq.s32.totalorder %s20, 0
      %p207 = por %p205, %p206
      %p208 = scmp.ne.s32.totalorder %s196, %s197
      %p209 = scmp.eq.s32.totalorder %s21, 3
      %p210 = por %p208, %p209
      %p212 = scmp.ne.s32.totalorder %s197, %s211
      %p213 = scmp.eq.s32.totalorder %s21, 0
      %p214 = por %p212, %p213
      %s216 = sadd.s32 %s215, 1
      %p219 = scmp.eq.s32.totalorder %s15, 3
      %p220 = scmp.ne.s32.totalorder %s215, %s217
      %p221 = scmp.eq.s32.totalorder %s15, 0
      %p222 = por %p220, %p221
      %p223 = scmp.ne.s32.totalorder %s215, %s217
      %p224 = scmp.eq.s32.totalorder %s20, 3
      %p225 = por %p223, %p224
      %p226 = scmp.ne.s32.totalorder %s217, %s218
      %p227 = scmp.eq.s32.totalorder %s20, 0
      %p228 = por %p226, %p227
      %p229 = scmp.ne.s32.totalorder %s217, %s218
      %p230 = scmp.eq.s32.totalorder %s21, 3
      %p231 = por %p229, %p230
      %p233 = scmp.ne.s32.totalorder %s218, %s232
      %p234 = scmp.eq.s32.totalorder %s21, 0
      %p235 = por %p233, %p234
      %s236 = ssub.s32 %s22, %s34
      %p237 = scmp.eq.s32.totalorder %s236, 0
      %s239 = sadd.s32 %s238, 1
      %s240 = scalar_select %p237, %s238, %s239
      %p243 = pneg %p237
      %p244 = scmp.eq.s32.totalorder %s15, 3
      %p245 = por %p243, %p244
      %p246 = scmp.ne.s32.totalorder %s238, %s241
      %p247 = scmp.eq.s32.totalorder %s15, 0
      %p248 = por %p246, %p247
      %p249 = scmp.ne.s32.totalorder %s238, %s241
      %p250 = scmp.eq.s32.totalorder %s20, 3
      %p251 = por %p249, %p250
      %p252 = scmp.ne.s32.totalorder %s241, %s242
      %p253 = scmp.eq.s32.totalorder %s20, 0
      %p254 = por %p252, %p253
      %p255 = scmp.ne.s32.totalorder %s241, %s242
      %p256 = scmp.eq.s32.totalorder %s21, 3
      %p257 = por %p255, %p256
      %p259 = scmp.ne.s32.totalorder %s242, %s258
      %p260 = scmp.eq.s32.totalorder %s21, 0
      %p261 = por %p259, %p260
      %p262 = scmp.le.s32.totalorder 1, %s15
      %p263 = scmp.lt.s32.totalorder %s15, 5
      %p264 = pnand %p262, %p263
      %p265 = pneg %p264
      // Predicated region
      $region9: #{neuralnet_forward.1} parent=5 // pred_check
        _
      $region10: #{neuralnet_forward.1} parent=5 // pred_check_branch
        %267 = sbr.rel (%p264) target = $region12
      $region11: #{neuralnet_forward.1} parent=5 // pred_region
        %s268 = ssub.s32 %s15, 1
        // Predicated region
        $region13: #{neuralnet_forward.1} parent=11 // pred_check
          %p269 = pneg %p102
        $region14: #{neuralnet_forward.1} parent=11 // pred_check_branch
          %271 = sbr.rel (%p269) target = $region16
        $region15: #{neuralnet_forward.1} parent=11 // pred_region
          _
        $region16: #{neuralnet_forward.1} parent=11 // pred_fallthru
          _
        // Predicated region
        $region17: #{neuralnet_forward.1} parent=11 // pred_check
          %p272 = pneg %p123
        $region18: #{neuralnet_forward.1} parent=11 // pred_check_branch
          %274 = sbr.rel (%p272) target = $region20
        $region19: #{neuralnet_forward.1} parent=11 // pred_region
          _
        $region20: #{neuralnet_forward.1} parent=11 // pred_fallthru
          _
        // Predicated region
        $region21: #{neuralnet_forward.1} parent=11 // pred_check
          %p275 = pneg %p144
        $region22: #{neuralnet_forward.1} parent=11 // pred_check_branch
          %277 = sbr.rel (%p275) target = $region24
        $region23: #{neuralnet_forward.1} parent=11 // pred_region
          _
        $region24: #{neuralnet_forward.1} parent=11 // pred_fallthru
          _
        // Predicated region
        $region25: #{neuralnet_forward.1} parent=11 // pred_check
          %p278 = pneg %p165
        $region26: #{neuralnet_forward.1} parent=11 // pred_check_branch
          %280 = sbr.rel (%p278) target = $region28
        $region27: #{neuralnet_forward.1} parent=11 // pred_region
          _
        $region28: #{neuralnet_forward.1} parent=11 // pred_fallthru
          _
        // Predicated region
        $region29: #{neuralnet_forward.1} parent=11 // pred_check
          %p281 = pneg %p186
        $region30: #{neuralnet_forward.1} parent=11 // pred_check_branch
          %283 = sbr.rel (%p281) target = $region32
        $region31: #{neuralnet_forward.1} parent=11 // pred_region
          _
        $region32: #{neuralnet_forward.1} parent=11 // pred_fallthru
          _
        // Predicated region
        $region33: #{neuralnet_forward.1} parent=11 // pred_check
          %p284 = pneg %p207
        $region34: #{neuralnet_forward.1} parent=11 // pred_check_branch
          %286 = sbr.rel (%p284) target = $region36
        $region35: #{neuralnet_forward.1} parent=11 // pred_region
          _
        $region36: #{neuralnet_forward.1} parent=11 // pred_fallthru
          _
        // Predicated region
        $region37: #{neuralnet_forward.1} parent=11 // pred_check
          %p287 = pneg %p228
        $region38: #{neuralnet_forward.1} parent=11 // pred_check_branch
          %289 = sbr.rel (%p287) target = $region40
        $region39: #{neuralnet_forward.1} parent=11 // pred_region
          _
        $region40: #{neuralnet_forward.1} parent=11 // pred_fallthru
          _
      $region12: #{neuralnet_forward.1} parent=5 // pred_fallthru
        _
      %p290 = scmp.lt.s32.totalorder %s15, 4
      // Predicated region
      $region41: #{neuralnet_forward.1} parent=5 // pred_check
        %p291 = pneg %p290
      $region42: #{neuralnet_forward.1} parent=5 // pred_check_branch
        %293 = sbr.rel (%p291) target = $region44
      $region43: #{neuralnet_forward.1} parent=5 // pred_region
        // Predicated region
        $region45: #{neuralnet_forward.1} parent=43 // pred_check
          %p294 = pneg %p49
        $region46: #{neuralnet_forward.1} parent=43 // pred_check_branch
          %296 = sbr.rel (%p294) target = $region48
        $region47: #{neuralnet_forward.1} parent=43 // pred_region
          %s297 = sand.u32 %s39, 1
          %s298 = sand.u32 %s39, 1
          %s299 = smul.addr %s298, 64
          %s300 = scalar_lea.vmem [#allocation3], %s299
          %s301 = smul.u32 16, %s22
          %s302 = smul.addr %s301, 4
          %s303 = sadd.s32 %s23, %s302
          %s304 = smul.addr %s303, 4
          %s305 = scalar_lea.vmem %s0, %s304
          // Predicated region
          $region49: #{neuralnet_forward.1} parent=47 // pred_check
            _
          $region50: #{neuralnet_forward.1} parent=47 // pred_check_branch
            %307 = sbr.rel (0) target = $region52
          $region51: #{neuralnet_forward.1} parent=47 // pred_region
            // Predicated region
            $region53: #{neuralnet_forward.1} parent=51 // pred_check
              _
            $region54: #{neuralnet_forward.1} parent=51 // pred_check_branch
              %309 = sbr.rel target = $region56
            $region55: #{neuralnet_forward.1} parent=51 // pred_region
              // Predicated region
              $region68: #{neuralnet_forward.1} parent=55 // pred_check
                _
              $region69: #{neuralnet_forward.1} parent=55 // pred_check_branch
                %354 = sbr.rel (0) target = $region71
              $region70: #{neuralnet_forward.1} parent=55 // pred_region
                loop: start=0, step=1, limit=1
                $region72: #{neuralnet_forward.1} parent=70 // loop_pre_header
                  _
                $region73: #{neuralnet_forward.1} parent=70 // loop_header
                  %s356 = sphi 0, %s360
                  %p357 = scmp.ge.s32.totalorder %s356, 1
                  %s361 = sphi %s305, %s305
                  %s362 = sphi %s300, %s300
                $region74: #{neuralnet_forward.1} parent=70 // loop_header_branch
                  %359 = sbr.rel (%p357) target = $region78
                $region75: #{neuralnet_forward.1} parent=70 // loop_body
                  _
                $region76: #{neuralnet_forward.1} parent=70 // loop_footer
                  %s360 = sadd.s32 1, %s356
                $region77: #{neuralnet_forward.1} parent=70 // loop_footer_branch
                  %355 = sbr.rel target = $region73
                $region78: #{neuralnet_forward.1} parent=70 // loop_exit
                  _
                loop: start=0, step=1, limit=1
                $region79: #{neuralnet_forward.1} parent=70 // loop_pre_header
                  _
                $region80: #{neuralnet_forward.1} parent=70 // loop_header
                  %s365 = sphi 0, %s369
                  %p366 = scmp.ge.s32.totalorder %s365, 1
                  %s370 = sphi %s305, %s305
                  %s371 = sphi %s300, %s300
                $region81: #{neuralnet_forward.1} parent=70 // loop_header_branch
                  %368 = sbr.rel (%p366) target = $region85
                $region82: #{neuralnet_forward.1} parent=70 // loop_body
                  %v372 = vld [vmem:[%s370] sm:$0xf]
                  %373 = vst [vmem:[%s371] sm:$0xf] %v372
                  %v374 = vld [vmem:[%s370 + $0x10] sm:$0xf]
                  %375 = vst [vmem:[%s371 + $0x4] sm:$0xf] %v374
                  %v376 = vld [vmem:[%s370 + $0x20] sm:$0xf]
                  %377 = vst [vmem:[%s371 + $0x8] sm:$0xf] %v376
                  %v378 = vld [vmem:[%s370 + $0x30] sm:$0xf]
                  %379 = vst [vmem:[%s371 + $0xc] sm:$0xf] %v378
                  %v380 = vld [vmem:[%s370 + $0x40] sm:$0xf]
                  %381 = vst [vmem:[%s371 + $0x10] sm:$0xf] %v380
                  %v382 = vld [vmem:[%s370 + $0x50] sm:$0xf]
                  %383 = vst [vmem:[%s371 + $0x14] sm:$0xf] %v382
                  %v384 = vld [vmem:[%s370 + $0x60] sm:$0xf]
                  %385 = vst [vmem:[%s371 + $0x18] sm:$0xf] %v384
                  %v386 = vld [vmem:[%s370 + $0x70] sm:$0xf]
                  %387 = vst [vmem:[%s371 + $0x1c] sm:$0xf] %v386
                  %v388 = vld [vmem:[%s370 + $0x80] sm:$0xf]
                  %389 = vst [vmem:[%s371 + $0x20] sm:$0xf] %v388
                  %v390 = vld [vmem:[%s370 + $0x90] sm:$0xf]
                  %391 = vst [vmem:[%s371 + $0x24] sm:$0xf] %v390
                  %v392 = vld [vmem:[%s370 + $0xa0] sm:$0xf]
                  %393 = vst [vmem:[%s371 + $0x28] sm:$0xf] %v392
                  %v394 = vld [vmem:[%s370 + $0xb0] sm:$0xf]
                  %395 = vst [vmem:[%s371 + $0x2c] sm:$0xf] %v394
                  %v396 = vld [vmem:[%s370 + $0xc0] sm:$0xf]
                  %397 = vst [vmem:[%s371 + $0x30] sm:$0xf] %v396
                  %v398 = vld [vmem:[%s370 + $0xd0] sm:$0xf]
                  %399 = vst [vmem:[%s371 + $0x34] sm:$0xf] %v398
                  %v400 = vld [vmem:[%s370 + $0xe0] sm:$0xf]
                  %401 = vst [vmem:[%s371 + $0x38] sm:$0xf] %v400
                  %v402 = vld [vmem:[%s370 + $0xf0] sm:$0xf]
                  %403 = vst [vmem:[%s371 + $0x3c] sm:$0xf] %v402
                $region83: #{neuralnet_forward.1} parent=70 // loop_footer
                  %s369 = sadd.s32 1, %s365
                $region84: #{neuralnet_forward.1} parent=70 // loop_footer_branch
                  %364 = sbr.rel target = $region80
                $region85: #{neuralnet_forward.1} parent=70 // loop_exit
                  _
              $region71: #{neuralnet_forward.1} parent=55 // pred_fallthru
                _
            $region56: #{neuralnet_forward.1} parent=51 // pred_fallthru
              _
            // Predicated region
            $region57: #{neuralnet_forward.1} parent=51 // pred_check
              _
            $region58: #{neuralnet_forward.1} parent=51 // pred_check_branch
              %311 = sbr.rel (0) target = $region60
            $region59: #{neuralnet_forward.1} parent=51 // pred_region
              loop: start=0, step=1, limit=1
              $region61: #{neuralnet_forward.1} parent=59 // loop_pre_header
                _
              $region62: #{neuralnet_forward.1} parent=59 // loop_header
                %s314 = sphi 0, %s318
                %p315 = scmp.ge.s32.totalorder %s314, 1
                %s319 = sphi %s305, %s305
                %s320 = sphi %s300, %s300
              $region63: #{neuralnet_forward.1} parent=59 // loop_header_branch
                %317 = sbr.rel (%p315) target = $region67
              $region64: #{neuralnet_forward.1} parent=59 // loop_body
                %v321 = vld [vmem:[%s319] sm:$0xf]
                %322 = vst [vmem:[%s320] sm:$0xf] %v321
                %v323 = vld [vmem:[%s319 + $0x10] sm:$0xf]
                %324 = vst [vmem:[%s320 + $0x4] sm:$0xf] %v323
                %v325 = vld [vmem:[%s319 + $0x20] sm:$0xf]
                %326 = vst [vmem:[%s320 + $0x8] sm:$0xf] %v325
                %v327 = vld [vmem:[%s319 + $0x30] sm:$0xf]
                %328 = vst [vmem:[%s320 + $0xc] sm:$0xf] %v327
                %v329 = vld [vmem:[%s319 + $0x40] sm:$0xf]
                %330 = vst [vmem:[%s320 + $0x10] sm:$0xf] %v329
                %v331 = vld [vmem:[%s319 + $0x50] sm:$0xf]
                %332 = vst [vmem:[%s320 + $0x14] sm:$0xf] %v331
                %v333 = vld [vmem:[%s319 + $0x60] sm:$0xf]
                %334 = vst [vmem:[%s320 + $0x18] sm:$0xf] %v333
                %v335 = vld [vmem:[%s319 + $0x70] sm:$0xf]
                %336 = vst [vmem:[%s320 + $0x1c] sm:$0xf] %v335
                %v337 = vld [vmem:[%s319 + $0x80] sm:$0xf]
                %338 = vst [vmem:[%s320 + $0x20] sm:$0xf] %v337
                %v339 = vld [vmem:[%s319 + $0x90] sm:$0xf]
                %340 = vst [vmem:[%s320 + $0x24] sm:$0xf] %v339
                %v341 = vld [vmem:[%s319 + $0xa0] sm:$0xf]
                %342 = vst [vmem:[%s320 + $0x28] sm:$0xf] %v341
                %v343 = vld [vmem:[%s319 + $0xb0] sm:$0xf]
                %344 = vst [vmem:[%s320 + $0x2c] sm:$0xf] %v343
                %v345 = vld [vmem:[%s319 + $0xc0] sm:$0xf]
                %346 = vst [vmem:[%s320 + $0x30] sm:$0xf] %v345
                %v347 = vld [vmem:[%s319 + $0xd0] sm:$0xf]
                %348 = vst [vmem:[%s320 + $0x34] sm:$0xf] %v347
                %v349 = vld [vmem:[%s319 + $0xe0] sm:$0xf]
                %350 = vst [vmem:[%s320 + $0x38] sm:$0xf] %v349
                %v351 = vld [vmem:[%s319 + $0xf0] sm:$0xf]
                %352 = vst [vmem:[%s320 + $0x3c] sm:$0xf] %v351
              $region65: #{neuralnet_forward.1} parent=59 // loop_footer
                %s318 = sadd.s32 1, %s314
              $region66: #{neuralnet_forward.1} parent=59 // loop_footer_branch
                %313 = sbr.rel target = $region62
              $region67: #{neuralnet_forward.1} parent=59 // loop_exit
                _
            $region60: #{neuralnet_forward.1} parent=51 // pred_fallthru
              _
          $region52: #{neuralnet_forward.1} parent=47 // pred_fallthru
            _
          %404 = vnop
        $region48: #{neuralnet_forward.1} parent=43 // pred_fallthru
          _
        // Predicated region
        $region86: #{neuralnet_forward.1} parent=43 // pred_check
          %p405 = pneg %p75
        $region87: #{neuralnet_forward.1} parent=43 // pred_check_branch
          %407 = sbr.rel (%p405) target = $region89
        $region88: #{neuralnet_forward.1} parent=43 // pred_region
          %s408 = smul.u32 16, %s23
          %p409 = scmp.lt.s32.totalorder %s408, 63
          %s410 = scalar_select %p409, %s408, 63
          %s411 = smul.addr %s410, 2
          %s412 = smul.addr %s411, 4
          %s413 = scalar_lea.vmem %s1, %s412
          %s414 = smul.u32 16, %s23
        $region89: #{neuralnet_forward.1} parent=43 // pred_fallthru
          _
      $region44: #{neuralnet_forward.1} parent=5 // pred_fallthru
        _
      %p415 = scmp.le.s32.totalorder 1, %s15
      %p416 = scmp.lt.s32.totalorder %s15, 5
      %p417 = pnand %p415, %p416
      %p418 = pneg %p417
      // Predicated region
      $region90: #{neuralnet_forward.1} parent=5 // pred_check
        _
      $region91: #{neuralnet_forward.1} parent=5 // pred_check_branch
        %420 = sbr.rel (%p417) target = $region93
      $region92: #{neuralnet_forward.1} parent=5 // pred_region
        %s421 = ssub.s32 %s15, 1
        %s422 = sand.u32 %s42, 1
        %s423 = sand.u32 %s42, 1
        %s424 = smul.addr %s423, 64
        %s425 = scalar_lea.vmem [#allocation3], %s424
        // Predicated region
        $region94: #{neuralnet_forward.1} parent=92 // pred_check
          %p426 = pneg %p55
        $region95: #{neuralnet_forward.1} parent=92 // pred_check_branch
          %428 = sbr.rel (%p426) target = $region97
        $region96: #{neuralnet_forward.1} parent=92 // pred_region
          _
        $region97: #{neuralnet_forward.1} parent=92 // pred_fallthru
          _
        %s429 = sand.u32 %s42, 1
        %s430 = sand.u32 %s42, 1
        %s431 = smul.addr %s430, 64
        %s432 = scalar_lea.vmem [#allocation3], %s431
        %p433 = pneg %p55
        %p434 = pneg %p52
        %s435 = smul.u32 16, %s25
        %p436 = scmp.lt.s32.totalorder %s435, 63
        %s437 = scalar_select %p436, %s435, 63
        %s438 = smul.addr %s437, 2
        %s439 = smul.addr %s438, 4
        %s440 = scalar_lea.vmem %s1, %s439
        %p441 = pneg %p81
        %p442 = pneg %p78
        %p443 = pneg %p102
        %p444 = pneg %p99
        %p445 = pneg %p123
        %p446 = pneg %p120
        %p447 = pneg %p144
        %p448 = pneg %p141
        %p449 = pneg %p165
        %p450 = pneg %p162
        %p451 = pneg %p186
        %p452 = pneg %p183
        %p453 = pneg %p207
        %p454 = pneg %p204
        %p455 = pneg %p228
        %p456 = pneg %p225
        %p457 = pneg %p254
        %p458 = pneg %p251
        %s459 = smul.u32 16, %s24
        %p460 = scmp.lt.s32.totalorder %s459, 15
        %s461 = scalar_select %p460, %s459, 15
        %s462 = smul.addr %s461, 8
        %s463 = scalar_lea.vmem %s9, %s462
        %s464 = smul.u32 16, %s24
        %s465 = smul.u32 16, %s25
        %p466 = scmp.lt.s32.totalorder %s465, 63
        %s467 = scalar_select %p466, %s465, 63
        %s468 = smul.addr %s467, 2
        %s469 = smul.addr %s468, 4
        %s470 = scalar_lea.vmem %s1, %s469
        %s471 = smul.u32 16, %s25
        %s472 = smul.u32 16, %s24
        %p473 = scmp.lt.s32.totalorder %s472, 15
        %s474 = scalar_select %p473, %s472, 15
        %s475 = smul.addr %s474, 8
        %s476 = scalar_lea.vmem %s9, %s475
        %s477 = smul.u32 16, %s24
        %p479 = scmp.eq.s32.totalorder %s25, 0
        // Predicated region
        $region98: #{neuralnet_forward.1} parent=92 // pred_check
          %p480 = pneg %p479
        $region99: #{neuralnet_forward.1} parent=92 // pred_check_branch
          %482 = sbr.rel (%p480) target = $region101
        $region100: #{neuralnet_forward.1} parent=92 // pred_region
          %483 = vst [vmem:[#allocation2] sm:$0xff] 0.0
          %484 = vst [vmem:[#allocation2 + $0x8] sm:$0xff] 0.0
          %485 = vst [vmem:[#allocation2 + $0x10] sm:$0xff] 0.0
          %486 = vst [vmem:[#allocation2 + $0x18] sm:$0xff] 0.0
          %487 = vst [vmem:[#allocation2 + $0x20] sm:$0xff] 0.0
          %488 = vst [vmem:[#allocation2 + $0x28] sm:$0xff] 0.0
          %489 = vst [vmem:[#allocation2 + $0x30] sm:$0xff] 0.0
          %490 = vst [vmem:[#allocation2 + $0x38] sm:$0xff] 0.0
          %491 = vst [vmem:[#allocation2 + $0x40] sm:$0xff] 0.0
          %492 = vst [vmem:[#allocation2 + $0x48] sm:$0xff] 0.0
          %493 = vst [vmem:[#allocation2 + $0x50] sm:$0xff] 0.0
          %494 = vst [vmem:[#allocation2 + $0x58] sm:$0xff] 0.0
          %495 = vst [vmem:[#allocation2 + $0x60] sm:$0xff] 0.0
          %496 = vst [vmem:[#allocation2 + $0x68] sm:$0xff] 0.0
          %497 = vst [vmem:[#allocation2 + $0x70] sm:$0xff] 0.0
          %498 = vst [vmem:[#allocation2 + $0x78] sm:$0xff] 0.0
          %499 = vst [vmem:[#allocation2 + $0x80] sm:$0xff] 0.0
          %500 = vst [vmem:[#allocation2 + $0x88] sm:$0xff] 0.0
          %501 = vst [vmem:[#allocation2 + $0x90] sm:$0xff] 0.0
          %502 = vst [vmem:[#allocation2 + $0x98] sm:$0xff] 0.0
          %503 = vst [vmem:[#allocation2 + $0xa0] sm:$0xff] 0.0
          %504 = vst [vmem:[#allocation2 + $0xa8] sm:$0xff] 0.0
          %505 = vst [vmem:[#allocation2 + $0xb0] sm:$0xff] 0.0
          %506 = vst [vmem:[#allocation2 + $0xb8] sm:$0xff] 0.0
          %507 = vst [vmem:[#allocation2 + $0xc0] sm:$0xff] 0.0
          %508 = vst [vmem:[#allocation2 + $0xc8] sm:$0xff] 0.0
          %509 = vst [vmem:[#allocation2 + $0xd0] sm:$0xff] 0.0
          %510 = vst [vmem:[#allocation2 + $0xd8] sm:$0xff] 0.0
          %511 = vst [vmem:[#allocation2 + $0xe0] sm:$0xff] 0.0
          %512 = vst [vmem:[#allocation2 + $0xe8] sm:$0xff] 0.0
          %513 = vst [vmem:[#allocation2 + $0xf0] sm:$0xff] 0.0
          %514 = vst [vmem:[#allocation2 + $0xf8] sm:$0xff] 0.0
        $region101: #{neuralnet_forward.1} parent=92 // pred_fallthru
          _
        %v515 = vld [vmem:[#allocation2] sm:$0xff]
        %v516 = vld [vmem:[#allocation2 + $0x8] sm:$0xff]
        %v517 = vld [vmem:[#allocation2 + $0x10] sm:$0xff]
        %v518 = vld [vmem:[#allocation2 + $0x18] sm:$0xff]
        %v519 = vld [vmem:[#allocation2 + $0x20] sm:$0xff]
        %v520 = vld [vmem:[#allocation2 + $0x28] sm:$0xff]
        %v521 = vld [vmem:[#allocation2 + $0x30] sm:$0xff]
        %v522 = vld [vmem:[#allocation2 + $0x38] sm:$0xff]
        %v523 = vld [vmem:[#allocation2 + $0x40] sm:$0xff]
        %v524 = vld [vmem:[#allocation2 + $0x48] sm:$0xff]
        %v525 = vld [vmem:[#allocation2 + $0x50] sm:$0xff]
        %v526 = vld [vmem:[#allocation2 + $0x58] sm:$0xff]
        %v527 = vld [vmem:[#allocation2 + $0x60] sm:$0xff]
        %v528 = vld [vmem:[#allocation2 + $0x68] sm:$0xff]
        %v529 = vld [vmem:[#allocation2 + $0x70] sm:$0xff]
        %v530 = vld [vmem:[#allocation2 + $0x78] sm:$0xff]
        %v531 = vld [vmem:[#allocation2 + $0x80] sm:$0xff]
        %v532 = vld [vmem:[#allocation2 + $0x88] sm:$0xff]
        %v533 = vld [vmem:[#allocation2 + $0x90] sm:$0xff]
        %v534 = vld [vmem:[#allocation2 + $0x98] sm:$0xff]
        %v535 = vld [vmem:[#allocation2 + $0xa0] sm:$0xff]
        %v536 = vld [vmem:[#allocation2 + $0xa8] sm:$0xff]
        %v537 = vld [vmem:[#allocation2 + $0xb0] sm:$0xff]
        %v538 = vld [vmem:[#allocation2 + $0xb8] sm:$0xff]
        %v539 = vld [vmem:[#allocation2 + $0xc0] sm:$0xff]
        %v540 = vld [vmem:[#allocation2 + $0xc8] sm:$0xff]
        %v541 = vld [vmem:[#allocation2 + $0xd0] sm:$0xff]
        %v542 = vld [vmem:[#allocation2 + $0xd8] sm:$0xff]
        %v543 = vld [vmem:[#allocation2 + $0xe0] sm:$0xff]
        %v544 = vld [vmem:[#allocation2 + $0xe8] sm:$0xff]
        %v545 = vld [vmem:[#allocation2 + $0xf0] sm:$0xff]
        %v546 = vld [vmem:[#allocation2 + $0xf8] sm:$0xff]
        %v547 = vld [vmem:[%s425] sm:$0xf]
        %v548 = vld [vmem:[%s425 + $0x4] sm:$0xf]
        %v549 = vld [vmem:[%s425 + $0x8] sm:$0xf]
        %v550 = vld [vmem:[%s425 + $0xc] sm:$0xf]
        %v551 = vld [vmem:[%s425 + $0x10] sm:$0xf]
        %v552 = vld [vmem:[%s425 + $0x14] sm:$0xf]
        %v553 = vld [vmem:[%s425 + $0x18] sm:$0xf]
        %v554 = vld [vmem:[%s425 + $0x1c] sm:$0xf]
        %v555 = vld [vmem:[%s425 + $0x20] sm:$0xf]
        %v556 = vld [vmem:[%s425 + $0x24] sm:$0xf]
        %v557 = vld [vmem:[%s425 + $0x28] sm:$0xf]
        %v558 = vld [vmem:[%s425 + $0x2c] sm:$0xf]
        %v559 = vld [vmem:[%s425 + $0x30] sm:$0xf]
        %v560 = vld [vmem:[%s425 + $0x34] sm:$0xf]
        %v561 = vld [vmem:[%s425 + $0x38] sm:$0xf]
        %v562 = vld [vmem:[%s425 + $0x3c] sm:$0xf]
        %v563 = vld [vmem:[%s470] sm:$0xff]
        %v564 = vld [vmem:[%s470 + $0x8] sm:$0xff]
        %v565 = vld [vmem:[%s470 + $0x10] sm:$0xff]
        %v566 = vld [vmem:[%s470 + $0x18] sm:$0xff]
        %v567 = vld [vmem:[%s470 + $0x20] sm:$0xff]
        %v568 = vld [vmem:[%s470 + $0x28] sm:$0xff]
        %v569 = vld [vmem:[%s470 + $0x30] sm:$0xff]
        %v570 = vld [vmem:[%s470 + $0x38] sm:$0xff]
        %v571 = vld [vmem:[%s470 + $0x40] sm:$0xff]
        %v572 = vld [vmem:[%s470 + $0x48] sm:$0xff]
        %v573 = vld [vmem:[%s470 + $0x50] sm:$0xff]
        %v574 = vld [vmem:[%s470 + $0x58] sm:$0xff]
        %v575 = vld [vmem:[%s470 + $0x60] sm:$0xff]
        %v576 = vld [vmem:[%s470 + $0x68] sm:$0xff]
        %v577 = vld [vmem:[%s470 + $0x70] sm:$0xff]
        %v578 = vld [vmem:[%s470 + $0x78] sm:$0xff]
        %v595 = vunpack.c.l.b16 %v547
        %v596 = vunpack.c.l.b16 %v548
        %v597 = vunpack.c.l.b16 %v549
        %v598 = vunpack.c.l.b16 %v550
        %v599 = vunpack.c.l.b16 %v551
        %v600 = vunpack.c.l.b16 %v552
        %v601 = vunpack.c.l.b16 %v553
        %v602 = vunpack.c.l.b16 %v554
        %v603 = vunpack.c.l.b16 %v555
        %v604 = vunpack.c.l.b16 %v556
        %v605 = vunpack.c.l.b16 %v557
        %v606 = vunpack.c.l.b16 %v558
        %v607 = vunpack.c.l.b16 %v559
        %v608 = vunpack.c.l.b16 %v560
        %v609 = vunpack.c.l.b16 %v561
        %v610 = vunpack.c.l.b16 %v562
        %v611 = vpack.c.b16 %v596, %v595
        %v612 = vpack.c.b16 %v598, %v597
        %v613 = vpack.c.b16 %v600, %v599
        %v614 = vpack.c.b16 %v602, %v601
        %v615 = vpack.c.b16 %v604, %v603
        %v616 = vpack.c.b16 %v606, %v605
        %v617 = vpack.c.b16 %v608, %v607
        %v618 = vpack.c.b16 %v610, %v609
        %v643 = vunpack.c.l.b16 %v563
        %v644 = vunpack.c.h.b16 %v563
        %v645 = vunpack.c.l.b16 %v564
        %v646 = vunpack.c.h.b16 %v564
        %v647 = vunpack.c.l.b16 %v565
        %v648 = vunpack.c.h.b16 %v565
        %v649 = vunpack.c.l.b16 %v566
        %v650 = vunpack.c.h.b16 %v566
        %v651 = vunpack.c.l.b16 %v567
        %v652 = vunpack.c.h.b16 %v567
        %v653 = vunpack.c.l.b16 %v568
        %v654 = vunpack.c.h.b16 %v568
        %v655 = vunpack.c.l.b16 %v569
        %v656 = vunpack.c.h.b16 %v569
        %v657 = vunpack.c.l.b16 %v570
        %v658 = vunpack.c.h.b16 %v570
        %v659 = vunpack.c.l.b16 %v571
        %v660 = vunpack.c.h.b16 %v571
        %v661 = vunpack.c.l.b16 %v572
        %v662 = vunpack.c.h.b16 %v572
        %v663 = vunpack.c.l.b16 %v573
        %v664 = vunpack.c.h.b16 %v573
        %v665 = vunpack.c.l.b16 %v574
        %v666 = vunpack.c.h.b16 %v574
        %v667 = vunpack.c.l.b16 %v575
        %v668 = vunpack.c.h.b16 %v575
        %v669 = vunpack.c.l.b16 %v576
        %v670 = vunpack.c.h.b16 %v576
        %v671 = vunpack.c.l.b16 %v577
        %v672 = vunpack.c.h.b16 %v577
        %v673 = vunpack.c.l.b16 %v578
        %v674 = vunpack.c.h.b16 %v578
        %v675 = vpack.c.b16 %v645, %v643
        %v676 = vpack.c.b16 %v646, %v644
        %v677 = vpack.c.b16 %v649, %v647
        %v678 = vpack.c.b16 %v650, %v648
        %v679 = vpack.c.b16 %v653, %v651
        %v680 = vpack.c.b16 %v654, %v652
        %v681 = vpack.c.b16 %v657, %v655
        %v682 = vpack.c.b16 %v658, %v656
        %v683 = vpack.c.b16 %v661, %v659
        %v684 = vpack.c.b16 %v662, %v660
        %v685 = vpack.c.b16 %v665, %v663
        %v686 = vpack.c.b16 %v666, %v664
        %v687 = vpack.c.b16 %v669, %v667
        %v688 = vpack.c.b16 %v670, %v668
        %v689 = vpack.c.b16 %v673, %v671
        %v690 = vpack.c.b16 %v674, %v672
        %707 = vmatprep.subr.bf16.mxu0 %v676
        %708 = vmatpush1.bf16.msra.mxu0 %v675
        %709 = vmatprep.subr.bf16.mxu0 %v678
        %710 = vmatpush1.bf16.msra.mxu0 %v677
        %711 = vmatprep.subr.bf16.mxu0 %v680
        %712 = vmatpush1.bf16.msra.mxu0 %v679
        %713 = vmatprep.subr.bf16.mxu0 %v682
        %714 = vmatpush1.bf16.msra.mxu0 %v681
        %715 = vmatprep.subr.bf16.mxu0 %v684
        %716 = vmatpush1.bf16.msra.mxu0 %v683
        %717 = vmatprep.subr.bf16.mxu0 %v686
        %718 = vmatpush1.bf16.msra.mxu0 %v685
        %719 = vmatprep.subr.bf16.mxu0 %v688
        %720 = vmatpush1.bf16.msra.mxu0 %v687
        %721 = vmatprep.subr.bf16.mxu0 %v690
        %722 = vmatpush1.bf16.msra.mxu0 %v689
        %723 = vmatprep.subr.bf16.mxu0 0
        %724 = vmatpush1.bf16.msra.mxu0 0
        %725 = vmatprep.subr.bf16.mxu0 0
        %726 = vmatpush1.bf16.msra.mxu0 0
        %727 = vmatprep.subr.bf16.mxu0 0
        %728 = vmatpush1.bf16.msra.mxu0 0
        %729 = vmatprep.subr.bf16.mxu0 0
        %730 = vmatpush1.bf16.msra.mxu0 0
        %731 = vmatprep.subr.bf16.mxu0 0
        %732 = vmatpush1.bf16.msra.mxu0 0
        %733 = vmatprep.subr.bf16.mxu0 0
        %734 = vmatpush1.bf16.msra.mxu0 0
        %735 = vmatprep.subr.bf16.mxu0 0
        %736 = vmatpush1.bf16.msra.mxu0 0
        %737 = vmatprep.subr.bf16.mxu0 0
        %738 = vmatpush1.bf16.msra.mxu0 0
        %739 = vmatprep.mubr.bf16.mxu0 0
        %740 = vmatmul.mubr.bf16.gmra.mrb[0].mxu0 %v611
        %v741 = vpop.f32.mrb[0].mxu0
        %v742 = vadd.f32 0.0, %v741
        %v743 = vpop.f32.mrb[0].mxu0
        %v744 = vadd.f32 0.0, %v743
        %v745 = vpop.f32.mrb[0].mxu0
        %v746 = vadd.f32 0.0, %v745
        %v747 = vpop.f32.mrb[0].mxu0
        %v748 = vadd.f32 0.0, %v747
        %749 = vmatprep.mubr.bf16.mxu0 0
        %750 = vmatmul.mubr.bf16.gmra.mrb[0].mxu0 %v612
        %v751 = vpop.f32.mrb[0].mxu0
        %v752 = vadd.f32 0.0, %v751
        %v753 = vpop.f32.mrb[0].mxu0
        %v754 = vadd.f32 0.0, %v753
        %v755 = vpop.f32.mrb[0].mxu0
        %v756 = vadd.f32 0.0, %v755
        %v757 = vpop.f32.mrb[0].mxu0
        %v758 = vadd.f32 0.0, %v757
        %759 = vmatprep.mubr.bf16.mxu0 0
        %760 = vmatmul.mubr.bf16.gmra.mrb[0].mxu0 %v613
        %v761 = vpop.f32.mrb[0].mxu0
        %v762 = vadd.f32 0.0, %v761
        %v763 = vpop.f32.mrb[0].mxu0
        %v764 = vadd.f32 0.0, %v763
        %v765 = vpop.f32.mrb[0].mxu0
        %v766 = vadd.f32 0.0, %v765
        %v767 = vpop.f32.mrb[0].mxu0
        %v768 = vadd.f32 0.0, %v767
        %769 = vmatprep.mubr.bf16.mxu0 0
        %770 = vmatmul.mubr.bf16.gmra.mrb[0].mxu0 %v614
        %v771 = vpop.f32.mrb[0].mxu0
        %v772 = vadd.f32 0.0, %v771
        %v773 = vpop.f32.mrb[0].mxu0
        %v774 = vadd.f32 0.0, %v773
        %v775 = vpop.f32.mrb[0].mxu0
        %v776 = vadd.f32 0.0, %v775
        %v777 = vpop.f32.mrb[0].mxu0
        %v778 = vadd.f32 0.0, %v777
        %779 = vmatprep.mubr.bf16.mxu0 0
        %780 = vmatmul.mubr.bf16.gmra.mrb[0].mxu0 %v615
        %v781 = vpop.f32.mrb[0].mxu0
        %v782 = vadd.f32 0.0, %v781
        %v783 = vpop.f32.mrb[0].mxu0
        %v784 = vadd.f32 0.0, %v783
        %v785 = vpop.f32.mrb[0].mxu0
        %v786 = vadd.f32 0.0, %v785
        %v787 = vpop.f32.mrb[0].mxu0
        %v788 = vadd.f32 0.0, %v787
        %789 = vmatprep.mubr.bf16.mxu0 0
        %790 = vmatmul.mubr.bf16.gmra.mrb[0].mxu0 %v616
        %v791 = vpop.f32.mrb[0].mxu0
        %v792 = vadd.f32 0.0, %v791
        %v793 = vpop.f32.mrb[0].mxu0
        %v794 = vadd.f32 0.0, %v793
        %v795 = vpop.f32.mrb[0].mxu0
        %v796 = vadd.f32 0.0, %v795
        %v797 = vpop.f32.mrb[0].mxu0
        %v798 = vadd.f32 0.0, %v797
        %799 = vmatprep.mubr.bf16.mxu0 0
        %800 = vmatmul.mubr.bf16.gmra.mrb[0].mxu0 %v617
        %v801 = vpop.f32.mrb[0].mxu0
        %v802 = vadd.f32 0.0, %v801
        %v803 = vpop.f32.mrb[0].mxu0
        %v804 = vadd.f32 0.0, %v803
        %v805 = vpop.f32.mrb[0].mxu0
        %v806 = vadd.f32 0.0, %v805
        %v807 = vpop.f32.mrb[0].mxu0
        %v808 = vadd.f32 0.0, %v807
        %809 = vmatprep.mubr.bf16.mxu0 0
        %810 = vmatmul.mubr.bf16.gmra.mrb[0].mxu0 %v618
        %v811 = vpop.f32.mrb[0].mxu0
        %v812 = vadd.f32 0.0, %v811
        %v813 = vpop.f32.mrb[0].mxu0
        %v814 = vadd.f32 0.0, %v813
        %v815 = vpop.f32.mrb[0].mxu0
        %v816 = vadd.f32 0.0, %v815
        %v817 = vpop.f32.mrb[0].mxu0
        %v818 = vadd.f32 0.0, %v817
        %819 = vdwg.mxu0
        %v820 = vadd.f32 %v515, %v742
        %v821 = vadd.f32 %v516, %v744
        %v822 = vadd.f32 %v517, %v746
        %v823 = vadd.f32 %v518, %v748
        %v824 = vadd.f32 %v519, %v752
        %v825 = vadd.f32 %v520, %v754
        %v826 = vadd.f32 %v521, %v756
        %v827 = vadd.f32 %v522, %v758
        %v828 = vadd.f32 %v523, %v762
        %v829 = vadd.f32 %v524, %v764
        %v830 = vadd.f32 %v525, %v766
        %v831 = vadd.f32 %v526, %v768
        %v832 = vadd.f32 %v527, %v772
        %v833 = vadd.f32 %v528, %v774
        %v834 = vadd.f32 %v529, %v776
        %v835 = vadd.f32 %v530, %v778
        %v836 = vadd.f32 %v531, %v782
        %v837 = vadd.f32 %v532, %v784
        %v838 = vadd.f32 %v533, %v786
        %v839 = vadd.f32 %v534, %v788
        %v840 = vadd.f32 %v535, %v792
        %v841 = vadd.f32 %v536, %v794
        %v842 = vadd.f32 %v537, %v796
        %v843 = vadd.f32 %v538, %v798
        %v844 = vadd.f32 %v539, %v802
        %v845 = vadd.f32 %v540, %v804
        %v846 = vadd.f32 %v541, %v806
        %v847 = vadd.f32 %v542, %v808
        %v848 = vadd.f32 %v543, %v812
        %v849 = vadd.f32 %v544, %v814
        %v850 = vadd.f32 %v545, %v816
        %v851 = vadd.f32 %v546, %v818
        %852 = vst [vmem:[#allocation2] sm:$0xff] %v820
        %853 = vst [vmem:[#allocation2 + $0x8] sm:$0xff] %v821
        %854 = vst [vmem:[#allocation2 + $0x10] sm:$0xff] %v822
        %855 = vst [vmem:[#allocation2 + $0x18] sm:$0xff] %v823
        %856 = vst [vmem:[#allocation2 + $0x20] sm:$0xff] %v824
        %857 = vst [vmem:[#allocation2 + $0x28] sm:$0xff] %v825
        %858 = vst [vmem:[#allocation2 + $0x30] sm:$0xff] %v826
        %859 = vst [vmem:[#allocation2 + $0x38] sm:$0xff] %v827
        %860 = vst [vmem:[#allocation2 + $0x40] sm:$0xff] %v828
        %861 = vst [vmem:[#allocation2 + $0x48] sm:$0xff] %v829
        %862 = vst [vmem:[#allocation2 + $0x50] sm:$0xff] %v830
        %863 = vst [vmem:[#allocation2 + $0x58] sm:$0xff] %v831
        %864 = vst [vmem:[#allocation2 + $0x60] sm:$0xff] %v832
        %865 = vst [vmem:[#allocation2 + $0x68] sm:$0xff] %v833
        %866 = vst [vmem:[#allocation2 + $0x70] sm:$0xff] %v834
        %867 = vst [vmem:[#allocation2 + $0x78] sm:$0xff] %v835
        %868 = vst [vmem:[#allocation2 + $0x80] sm:$0xff] %v836
        %869 = vst [vmem:[#allocation2 + $0x88] sm:$0xff] %v837
        %870 = vst [vmem:[#allocation2 + $0x90] sm:$0xff] %v838
        %871 = vst [vmem:[#allocation2 + $0x98] sm:$0xff] %v839
        %872 = vst [vmem:[#allocation2 + $0xa0] sm:$0xff] %v840
        %873 = vst [vmem:[#allocation2 + $0xa8] sm:$0xff] %v841
        %874 = vst [vmem:[#allocation2 + $0xb0] sm:$0xff] %v842
        %875 = vst [vmem:[#allocation2 + $0xb8] sm:$0xff] %v843
        %876 = vst [vmem:[#allocation2 + $0xc0] sm:$0xff] %v844
        %877 = vst [vmem:[#allocation2 + $0xc8] sm:$0xff] %v845
        %878 = vst [vmem:[#allocation2 + $0xd0] sm:$0xff] %v846
        %879 = vst [vmem:[#allocation2 + $0xd8] sm:$0xff] %v847
        %880 = vst [vmem:[#allocation2 + $0xe0] sm:$0xff] %v848
        %881 = vst [vmem:[#allocation2 + $0xe8] sm:$0xff] %v849
        %882 = vst [vmem:[#allocation2 + $0xf0] sm:$0xff] %v850
        %883 = vst [vmem:[#allocation2 + $0xf8] sm:$0xff] %v851
        %p884 = scmp.eq.s32.totalorder %s25, 3
        // Predicated region
        $region102: #{neuralnet_forward.1} parent=92 // pred_check
          %p885 = pneg %p884
        $region103: #{neuralnet_forward.1} parent=92 // pred_check_branch
          %887 = sbr.rel (%p885) target = $region105
        $region104: #{neuralnet_forward.1} parent=92 // pred_region
          %v888 = vld [vmem:[#allocation2] sm:$0xff]
          %v889 = vld [vmem:[#allocation2 + $0x8] sm:$0xff]
          %v890 = vld [vmem:[#allocation2 + $0x10] sm:$0xff]
          %v891 = vld [vmem:[#allocation2 + $0x18] sm:$0xff]
          %v892 = vld [vmem:[#allocation2 + $0x20] sm:$0xff]
          %v893 = vld [vmem:[#allocation2 + $0x28] sm:$0xff]
          %v894 = vld [vmem:[#allocation2 + $0x30] sm:$0xff]
          %v895 = vld [vmem:[#allocation2 + $0x38] sm:$0xff]
          %v896 = vld [vmem:[#allocation2 + $0x40] sm:$0xff]
          %v897 = vld [vmem:[#allocation2 + $0x48] sm:$0xff]
          %v898 = vld [vmem:[#allocation2 + $0x50] sm:$0xff]
          %v899 = vld [vmem:[#allocation2 + $0x58] sm:$0xff]
          %v900 = vld [vmem:[#allocation2 + $0x60] sm:$0xff]
          %v901 = vld [vmem:[#allocation2 + $0x68] sm:$0xff]
          %v902 = vld [vmem:[#allocation2 + $0x70] sm:$0xff]
          %v903 = vld [vmem:[#allocation2 + $0x78] sm:$0xff]
          %v904 = vld [vmem:[#allocation2 + $0x80] sm:$0xff]
          %v905 = vld [vmem:[#allocation2 + $0x88] sm:$0xff]
          %v906 = vld [vmem:[#allocation2 + $0x90] sm:$0xff]
          %v907 = vld [vmem:[#allocation2 + $0x98] sm:$0xff]
          %v908 = vld [vmem:[#allocation2 + $0xa0] sm:$0xff]
          %v909 = vld [vmem:[#allocation2 + $0xa8] sm:$0xff]
          %v910 = vld [vmem:[#allocation2 + $0xb0] sm:$0xff]
          %v911 = vld [vmem:[#allocation2 + $0xb8] sm:$0xff]
          %v912 = vld [vmem:[#allocation2 + $0xc0] sm:$0xff]
          %v913 = vld [vmem:[#allocation2 + $0xc8] sm:$0xff]
          %v914 = vld [vmem:[#allocation2 + $0xd0] sm:$0xff]
          %v915 = vld [vmem:[#allocation2 + $0xd8] sm:$0xff]
          %v916 = vld [vmem:[#allocation2 + $0xe0] sm:$0xff]
          %v917 = vld [vmem:[#allocation2 + $0xe8] sm:$0xff]
          %v918 = vld [vmem:[#allocation2 + $0xf0] sm:$0xff]
          %v919 = vld [vmem:[#allocation2 + $0xf8] sm:$0xff]
          %v920 = vld [vmem:[%s2] sm:$0x3]
          %v922 = vlaneseq
          %v923 = vshrl.u32 %v922, 7
          %v924 = vsub.s32 0, %v923
          %v925 = vrot.slane %v920, %v924
          %v926 = vlaneseq
          %v927 = vshrl.u32 %v926, 7
          %v928 = vsub.s32 1, %v927
          %v929 = vrot.slane %v920, %v928
          %v932 = vadd.f32 %v888, %v925
          %v933 = vadd.f32 %v889, %v929
          %v934 = vadd.f32 %v890, %v925
          %v935 = vadd.f32 %v891, %v929
          %v936 = vadd.f32 %v892, %v925
          %v937 = vadd.f32 %v893, %v929
          %v938 = vadd.f32 %v894, %v925
          %v939 = vadd.f32 %v895, %v929
          %v940 = vadd.f32 %v896, %v925
          %v941 = vadd.f32 %v897, %v929
          %v942 = vadd.f32 %v898, %v925
          %v943 = vadd.f32 %v899, %v929
          %v944 = vadd.f32 %v900, %v925
          %v945 = vadd.f32 %v901, %v929
          %v946 = vadd.f32 %v902, %v925
          %v947 = vadd.f32 %v903, %v929
          %v948 = vadd.f32 %v904, %v925
          %v949 = vadd.f32 %v905, %v929
          %v950 = vadd.f32 %v906, %v925
          %v951 = vadd.f32 %v907, %v929
          %v952 = vadd.f32 %v908, %v925
          %v953 = vadd.f32 %v909, %v929
          %v954 = vadd.f32 %v910, %v925
          %v955 = vadd.f32 %v911, %v929
          %v956 = vadd.f32 %v912, %v925
          %v957 = vadd.f32 %v913, %v929
          %v958 = vadd.f32 %v914, %v925
          %v959 = vadd.f32 %v915, %v929
          %v960 = vadd.f32 %v916, %v925
          %v961 = vadd.f32 %v917, %v929
          %v962 = vadd.f32 %v918, %v925
          %v963 = vadd.f32 %v919, %v929
          %v964 = vmax.f32 %v932, 0.0
          %v965 = vmax.f32 %v933, 0.0
          %v966 = vmax.f32 %v934, 0.0
          %v967 = vmax.f32 %v935, 0.0
          %v968 = vmax.f32 %v936, 0.0
          %v969 = vmax.f32 %v937, 0.0
          %v970 = vmax.f32 %v938, 0.0
          %v971 = vmax.f32 %v939, 0.0
          %v972 = vmax.f32 %v940, 0.0
          %v973 = vmax.f32 %v941, 0.0
          %v974 = vmax.f32 %v942, 0.0
          %v975 = vmax.f32 %v943, 0.0
          %v976 = vmax.f32 %v944, 0.0
          %v977 = vmax.f32 %v945, 0.0
          %v978 = vmax.f32 %v946, 0.0
          %v979 = vmax.f32 %v947, 0.0
          %v980 = vmax.f32 %v948, 0.0
          %v981 = vmax.f32 %v949, 0.0
          %v982 = vmax.f32 %v950, 0.0
          %v983 = vmax.f32 %v951, 0.0
          %v984 = vmax.f32 %v952, 0.0
          %v985 = vmax.f32 %v953, 0.0
          %v986 = vmax.f32 %v954, 0.0
          %v987 = vmax.f32 %v955, 0.0
          %v988 = vmax.f32 %v956, 0.0
          %v989 = vmax.f32 %v957, 0.0
          %v990 = vmax.f32 %v958, 0.0
          %v991 = vmax.f32 %v959, 0.0
          %v992 = vmax.f32 %v960, 0.0
          %v993 = vmax.f32 %v961, 0.0
          %v994 = vmax.f32 %v962, 0.0
          %v995 = vmax.f32 %v963, 0.0
          %v996 = vpack.c.bf16 %v966, %v964
          %v997 = vpack.c.bf16 %v967, %v965
          %v998 = vpack.c.bf16 %v970, %v968
          %v999 = vpack.c.bf16 %v971, %v969
          %v1000 = vpack.c.bf16 %v974, %v972
          %v1001 = vpack.c.bf16 %v975, %v973
          %v1002 = vpack.c.bf16 %v978, %v976
          %v1003 = vpack.c.bf16 %v979, %v977
          %v1004 = vpack.c.bf16 %v982, %v980
          %v1005 = vpack.c.bf16 %v983, %v981
          %v1006 = vpack.c.bf16 %v986, %v984
          %v1007 = vpack.c.bf16 %v987, %v985
          %v1008 = vpack.c.bf16 %v990, %v988
          %v1009 = vpack.c.bf16 %v991, %v989
          %v1010 = vpack.c.bf16 %v994, %v992
          %v1011 = vpack.c.bf16 %v995, %v993
          %v1012 = vld [vmem:[%s3] sm:$0xf]
          %v1013 = vld [vmem:[%s3 + $0x4] sm:$0xf]
          %v1014 = vld [vmem:[%s3 + $0x8] sm:$0xf]
          %v1015 = vld [vmem:[%s3 + $0xc] sm:$0xf]
          %v1016 = vld [vmem:[%s3 + $0x10] sm:$0xf]
          %v1017 = vld [vmem:[%s3 + $0x14] sm:$0xf]
          %v1018 = vld [vmem:[%s3 + $0x18] sm:$0xf]
          %v1019 = vld [vmem:[%s3 + $0x1c] sm:$0xf]
          %v1020 = vld [vmem:[%s3 + $0x20] sm:$0xf]
          %v1021 = vld [vmem:[%s3 + $0x24] sm:$0xf]
          %v1022 = vld [vmem:[%s3 + $0x28] sm:$0xf]
          %v1023 = vld [vmem:[%s3 + $0x2c] sm:$0xf]
          %v1024 = vld [vmem:[%s3 + $0x30] sm:$0xf]
          %v1025 = vld [vmem:[%s3 + $0x34] sm:$0xf]
          %v1026 = vld [vmem:[%s3 + $0x38] sm:$0xf]
          %v1027 = vld [vmem:[%s3 + $0x3c] sm:$0xf]
          %v1028 = vld [vmem:[%s3 + $0x40] sm:$0xf]
          %v1029 = vld [vmem:[%s3 + $0x44] sm:$0xf]
          %v1030 = vld [vmem:[%s3 + $0x48] sm:$0xf]
          %v1031 = vld [vmem:[%s3 + $0x4c] sm:$0xf]
          %v1032 = vld [vmem:[%s3 + $0x50] sm:$0xf]
          %v1033 = vld [vmem:[%s3 + $0x54] sm:$0xf]
          %v1034 = vld [vmem:[%s3 + $0x58] sm:$0xf]
          %v1035 = vld [vmem:[%s3 + $0x5c] sm:$0xf]
          %v1036 = vld [vmem:[%s3 + $0x60] sm:$0xf]
          %v1037 = vld [vmem:[%s3 + $0x64] sm:$0xf]
          %v1038 = vld [vmem:[%s3 + $0x68] sm:$0xf]
          %v1039 = vld [vmem:[%s3 + $0x6c] sm:$0xf]
          %v1040 = vld [vmem:[%s3 + $0x70] sm:$0xf]
          %v1041 = vld [vmem:[%s3 + $0x74] sm:$0xf]
          %v1042 = vld [vmem:[%s3 + $0x78] sm:$0xf]
          %v1043 = vld [vmem:[%s3 + $0x7c] sm:$0xf]
          %v1044 = vld [vmem:[%s4] sm:$0x1]
          %v1046 = vlaneseq
          %v1047 = vshrl.u32 %v1046, 7
          %v1048 = vsub.s32 0, %v1047
          %v1049 = vrot.slane %v1044, %v1048
          %v1083 = vunpack.c.l.b16 %v1012
          %v1084 = vunpack.c.l.b16 %v1013
          %v1085 = vunpack.c.l.b16 %v1014
          %v1086 = vunpack.c.l.b16 %v1015
          %v1087 = vunpack.c.l.b16 %v1016
          %v1088 = vunpack.c.l.b16 %v1017
          %v1089 = vunpack.c.l.b16 %v1018
          %v1090 = vunpack.c.l.b16 %v1019
          %v1091 = vunpack.c.l.b16 %v1020
          %v1092 = vunpack.c.l.b16 %v1021
          %v1093 = vunpack.c.l.b16 %v1022
          %v1094 = vunpack.c.l.b16 %v1023
          %v1095 = vunpack.c.l.b16 %v1024
          %v1096 = vunpack.c.l.b16 %v1025
          %v1097 = vunpack.c.l.b16 %v1026
          %v1098 = vunpack.c.l.b16 %v1027
          %v1099 = vunpack.c.l.b16 %v1028
          %v1100 = vunpack.c.l.b16 %v1029
          %v1101 = vunpack.c.l.b16 %v1030
          %v1102 = vunpack.c.l.b16 %v1031
          %v1103 = vunpack.c.l.b16 %v1032
          %v1104 = vunpack.c.l.b16 %v1033
          %v1105 = vunpack.c.l.b16 %v1034
          %v1106 = vunpack.c.l.b16 %v1035
          %v1107 = vunpack.c.l.b16 %v1036
          %v1108 = vunpack.c.l.b16 %v1037
          %v1109 = vunpack.c.l.b16 %v1038
          %v1110 = vunpack.c.l.b16 %v1039
          %v1111 = vunpack.c.l.b16 %v1040
          %v1112 = vunpack.c.l.b16 %v1041
          %v1113 = vunpack.c.l.b16 %v1042
          %v1114 = vunpack.c.l.b16 %v1043
          %v1115 = vpack.c.b16 %v1084, %v1083
          %v1116 = vpack.c.b16 %v1086, %v1085
          %v1117 = vpack.c.b16 %v1088, %v1087
          %v1118 = vpack.c.b16 %v1090, %v1089
          %v1119 = vpack.c.b16 %v1092, %v1091
          %v1120 = vpack.c.b16 %v1094, %v1093
          %v1121 = vpack.c.b16 %v1096, %v1095
          %v1122 = vpack.c.b16 %v1098, %v1097
          %v1123 = vpack.c.b16 %v1100, %v1099
          %v1124 = vpack.c.b16 %v1102, %v1101
          %v1125 = vpack.c.b16 %v1104, %v1103
          %v1126 = vpack.c.b16 %v1106, %v1105
          %v1127 = vpack.c.b16 %v1108, %v1107
          %v1128 = vpack.c.b16 %v1110, %v1109
          %v1129 = vpack.c.b16 %v1112, %v1111
          %v1130 = vpack.c.b16 %v1114, %v1113
          %1147 = vmatprep.subr.bf16.mxu0 0
          %1148 = vmatpush1.bf16.msra.mxu0 %v1115
          %1149 = vmatprep.subr.bf16.mxu0 0
          %1150 = vmatpush1.bf16.msra.mxu0 %v1116
          %1151 = vmatprep.subr.bf16.mxu0 0
          %1152 = vmatpush1.bf16.msra.mxu0 %v1117
          %1153 = vmatprep.subr.bf16.mxu0 0
          %1154 = vmatpush1.bf16.msra.mxu0 %v1118
          %1155 = vmatprep.subr.bf16.mxu0 0
          %1156 = vmatpush1.bf16.msra.mxu0 %v1119
          %1157 = vmatprep.subr.bf16.mxu0 0
          %1158 = vmatpush1.bf16.msra.mxu0 %v1120
          %1159 = vmatprep.subr.bf16.mxu0 0
          %1160 = vmatpush1.bf16.msra.mxu0 %v1121
          %1161 = vmatprep.subr.bf16.mxu0 0
          %1162 = vmatpush1.bf16.msra.mxu0 %v1122
          %1163 = vmatprep.subr.bf16.mxu0 0
          %1164 = vmatpush1.bf16.msra.mxu0 %v1123
          %1165 = vmatprep.subr.bf16.mxu0 0
          %1166 = vmatpush1.bf16.msra.mxu0 %v1124
          %1167 = vmatprep.subr.bf16.mxu0 0
          %1168 = vmatpush1.bf16.msra.mxu0 %v1125
          %1169 = vmatprep.subr.bf16.mxu0 0
          %1170 = vmatpush1.bf16.msra.mxu0 %v1126
          %1171 = vmatprep.subr.bf16.mxu0 0
          %1172 = vmatpush1.bf16.msra.mxu0 %v1127
          %1173 = vmatprep.subr.bf16.mxu0 0
          %1174 = vmatpush1.bf16.msra.mxu0 %v1128
          %1175 = vmatprep.subr.bf16.mxu0 0
          %1176 = vmatpush1.bf16.msra.mxu0 %v1129
          %1177 = vmatprep.subr.bf16.mxu0 0
          %1178 = vmatpush1.bf16.msra.mxu0 %v1130
          %1179 = vmatprep.mubr.bf16.mxu0 %v997
          %1180 = vmatmul.mubr.bf16.gmra.mrb[0].mxu0 %v996
          %v1181 = vpop.f32.mrb[0].mxu0
          %v1182 = vadd.f32 %v1049, %v1181
          %v1183 = vpop.f32.mrb[0].mxu0
          %v1184 = vpop.f32.mrb[0].mxu0
          %v1185 = vadd.f32 %v1049, %v1184
          %v1186 = vpop.f32.mrb[0].mxu0
          %1187 = vmatprep.mubr.bf16.mxu0 %v999
          %1188 = vmatmul.mubr.bf16.gmra.mrb[0].mxu0 %v998
          %v1189 = vpop.f32.mrb[0].mxu0
          %v1190 = vadd.f32 %v1049, %v1189
          %v1191 = vpop.f32.mrb[0].mxu0
          %v1192 = vpop.f32.mrb[0].mxu0
          %v1193 = vadd.f32 %v1049, %v1192
          %v1194 = vpop.f32.mrb[0].mxu0
          %1195 = vmatprep.mubr.bf16.mxu0 %v1001
          %1196 = vmatmul.mubr.bf16.gmra.mrb[0].mxu0 %v1000
          %v1197 = vpop.f32.mrb[0].mxu0
          %v1198 = vadd.f32 %v1049, %v1197
          %v1199 = vpop.f32.mrb[0].mxu0
          %v1200 = vpop.f32.mrb[0].mxu0
          %v1201 = vadd.f32 %v1049, %v1200
          %v1202 = vpop.f32.mrb[0].mxu0
          %1203 = vmatprep.mubr.bf16.mxu0 %v1003
          %1204 = vmatmul.mubr.bf16.gmra.mrb[0].mxu0 %v1002
          %v1205 = vpop.f32.mrb[0].mxu0
          %v1206 = vadd.f32 %v1049, %v1205
          %v1207 = vpop.f32.mrb[0].mxu0
          %v1208 = vpop.f32.mrb[0].mxu0
          %v1209 = vadd.f32 %v1049, %v1208
          %v1210 = vpop.f32.mrb[0].mxu0
          %1211 = vmatprep.mubr.bf16.mxu0 %v1005
          %1212 = vmatmul.mubr.bf16.gmra.mrb[0].mxu0 %v1004
          %v1213 = vpop.f32.mrb[0].mxu0
          %v1214 = vadd.f32 %v1049, %v1213
          %v1215 = vpop.f32.mrb[0].mxu0
          %v1216 = vpop.f32.mrb[0].mxu0
          %v1217 = vadd.f32 %v1049, %v1216
          %v1218 = vpop.f32.mrb[0].mxu0
          %1219 = vmatprep.mubr.bf16.mxu0 %v1007
          %1220 = vmatmul.mubr.bf16.gmra.mrb[0].mxu0 %v1006
          %v1221 = vpop.f32.mrb[0].mxu0
          %v1222 = vadd.f32 %v1049, %v1221
          %v1223 = vpop.f32.mrb[0].mxu0
          %v1224 = vpop.f32.mrb[0].mxu0
          %v1225 = vadd.f32 %v1049, %v1224
          %v1226 = vpop.f32.mrb[0].mxu0
          %1227 = vmatprep.mubr.bf16.mxu0 %v1009
          %1228 = vmatmul.mubr.bf16.gmra.mrb[0].mxu0 %v1008
          %v1229 = vpop.f32.mrb[0].mxu0
          %v1230 = vadd.f32 %v1049, %v1229
          %v1231 = vpop.f32.mrb[0].mxu0
          %v1232 = vpop.f32.mrb[0].mxu0
          %v1233 = vadd.f32 %v1049, %v1232
          %v1234 = vpop.f32.mrb[0].mxu0
          %1235 = vmatprep.mubr.bf16.mxu0 %v1011
          %1236 = vmatmul.mubr.bf16.gmra.mrb[0].mxu0 %v1010
          %v1237 = vpop.f32.mrb[0].mxu0
          %v1238 = vadd.f32 %v1049, %v1237
          %v1239 = vpop.f32.mrb[0].mxu0
          %v1240 = vpop.f32.mrb[0].mxu0
          %v1241 = vadd.f32 %v1049, %v1240
          %v1242 = vpop.f32.mrb[0].mxu0
          %1243 = vdwg.mxu0
          %v1244 = vmax.f32 %v1182, 0.0
          %v1245 = vmax.f32 %v1185, 0.0
          %v1246 = vmax.f32 %v1190, 0.0
          %v1247 = vmax.f32 %v1193, 0.0
          %v1248 = vmax.f32 %v1198, 0.0
          %v1249 = vmax.f32 %v1201, 0.0
          %v1250 = vmax.f32 %v1206, 0.0
          %v1251 = vmax.f32 %v1209, 0.0
          %v1252 = vmax.f32 %v1214, 0.0
          %v1253 = vmax.f32 %v1217, 0.0
          %v1254 = vmax.f32 %v1222, 0.0
          %v1255 = vmax.f32 %v1225, 0.0
          %v1256 = vmax.f32 %v1230, 0.0
          %v1257 = vmax.f32 %v1233, 0.0
          %v1258 = vmax.f32 %v1238, 0.0
          %v1259 = vmax.f32 %v1241, 0.0
          %v1260 = vpack.c.bf16 %v1245, %v1244
          %v1261 = vpack.c.bf16 %v1247, %v1246
          %v1262 = vpack.c.bf16 %v1249, %v1248
          %v1263 = vpack.c.bf16 %v1251, %v1250
          %v1264 = vpack.c.bf16 %v1253, %v1252
          %v1265 = vpack.c.bf16 %v1255, %v1254
          %v1266 = vpack.c.bf16 %v1257, %v1256
          %v1267 = vpack.c.bf16 %v1259, %v1258
          %v1268 = vld [vmem:[%s5] sm:$0xf]
          %v1269 = vld [vmem:[%s5 + $0x4] sm:$0xf]
          %v1270 = vld [vmem:[%s5 + $0x8] sm:$0xf]
          %v1271 = vld [vmem:[%s5 + $0xc] sm:$0xf]
          %v1272 = vld [vmem:[%s5 + $0x10] sm:$0xf]
          %v1273 = vld [vmem:[%s5 + $0x14] sm:$0xf]
          %v1274 = vld [vmem:[%s5 + $0x18] sm:$0xf]
          %v1275 = vld [vmem:[%s5 + $0x1c] sm:$0xf]
          %v1276 = vld [vmem:[%s5 + $0x20] sm:$0xf]
          %v1277 = vld [vmem:[%s5 + $0x24] sm:$0xf]
          %v1278 = vld [vmem:[%s5 + $0x28] sm:$0xf]
          %v1279 = vld [vmem:[%s5 + $0x2c] sm:$0xf]
          %v1280 = vld [vmem:[%s5 + $0x30] sm:$0xf]
          %v1281 = vld [vmem:[%s5 + $0x34] sm:$0xf]
          %v1282 = vld [vmem:[%s5 + $0x38] sm:$0xf]
          %v1283 = vld [vmem:[%s5 + $0x3c] sm:$0xf]
          %v1284 = vld [vmem:[%s6] sm:$0x1]
          %v1286 = vlaneseq
          %v1287 = vshrl.u32 %v1286, 7
          %v1288 = vsub.s32 0, %v1287
          %v1289 = vrot.slane %v1284, %v1288
          %v1307 = vunpack.c.l.b16 %v1268
          %v1308 = vunpack.c.l.b16 %v1269
          %v1309 = vunpack.c.l.b16 %v1270
          %v1310 = vunpack.c.l.b16 %v1271
          %v1311 = vunpack.c.l.b16 %v1272
          %v1312 = vunpack.c.l.b16 %v1273
          %v1313 = vunpack.c.l.b16 %v1274
          %v1314 = vunpack.c.l.b16 %v1275
          %v1315 = vunpack.c.l.b16 %v1276
          %v1316 = vunpack.c.l.b16 %v1277
          %v1317 = vunpack.c.l.b16 %v1278
          %v1318 = vunpack.c.l.b16 %v1279
          %v1319 = vunpack.c.l.b16 %v1280
          %v1320 = vunpack.c.l.b16 %v1281
          %v1321 = vunpack.c.l.b16 %v1282
          %v1322 = vunpack.c.l.b16 %v1283
          %v1323 = vpack.c.b16 %v1308, %v1307
          %v1324 = vpack.c.b16 %v1310, %v1309
          %v1325 = vpack.c.b16 %v1312, %v1311
          %v1326 = vpack.c.b16 %v1314, %v1313
          %v1327 = vpack.c.b16 %v1316, %v1315
          %v1328 = vpack.c.b16 %v1318, %v1317
          %v1329 = vpack.c.b16 %v1320, %v1319
          %v1330 = vpack.c.b16 %v1322, %v1321
          %1339 = vmatprep.subr.bf16.mxu0 0
          %1340 = vmatpush1.bf16.msra.mxu0 %v1323
          %1341 = vmatprep.subr.bf16.mxu0 0
          %1342 = vmatpush1.bf16.msra.mxu0 %v1324
          %1343 = vmatprep.subr.bf16.mxu0 0
          %1344 = vmatpush1.bf16.msra.mxu0 %v1325
          %1345 = vmatprep.subr.bf16.mxu0 0
          %1346 = vmatpush1.bf16.msra.mxu0 %v1326
          %1347 = vmatprep.subr.bf16.mxu0 0
          %1348 = vmatpush1.bf16.msra.mxu0 %v1327
          %1349 = vmatprep.subr.bf16.mxu0 0
          %1350 = vmatpush1.bf16.msra.mxu0 %v1328
          %1351 = vmatprep.subr.bf16.mxu0 0
          %1352 = vmatpush1.bf16.msra.mxu0 %v1329
          %1353 = vmatprep.subr.bf16.mxu0 0
          %1354 = vmatpush1.bf16.msra.mxu0 %v1330
          %1355 = vmatprep.subr.bf16.mxu0 0
          %1356 = vmatpush1.bf16.msra.mxu0 0
          %1357 = vmatprep.subr.bf16.mxu0 0
          %1358 = vmatpush1.bf16.msra.mxu0 0
          %1359 = vmatprep.subr.bf16.mxu0 0
          %1360 = vmatpush1.bf16.msra.mxu0 0
          %1361 = vmatprep.subr.bf16.mxu0 0
          %1362 = vmatpush1.bf16.msra.mxu0 0
          %1363 = vmatprep.subr.bf16.mxu0 0
          %1364 = vmatpush1.bf16.msra.mxu0 0
          %1365 = vmatprep.subr.bf16.mxu0 0
          %1366 = vmatpush1.bf16.msra.mxu0 0
          %1367 = vmatprep.subr.bf16.mxu0 0
          %1368 = vmatpush1.bf16.msra.mxu0 0
          %1369 = vmatprep.subr.bf16.mxu0 0
          %1370 = vmatpush1.bf16.msra.mxu0 0
          %1371 = vmatprep.mubr.bf16.mxu0 0
          %1372 = vmatmul.mubr.bf16.gmra.mrb[0].mxu0 %v1260
          %v1373 = vpop.f32.mrb[0].mxu0
          %v1374 = vadd.f32 %v1289, %v1373
          %v1375 = vpop.f32.mrb[0].mxu0
          %v1376 = vpop.f32.mrb[0].mxu0
          %v1377 = vadd.f32 %v1289, %v1376
          %v1378 = vpop.f32.mrb[0].mxu0
          %1379 = vmatprep.mubr.bf16.mxu0 0
          %1380 = vmatmul.mubr.bf16.gmra.mrb[0].mxu0 %v1261
          %v1381 = vpop.f32.mrb[0].mxu0
          %v1382 = vadd.f32 %v1289, %v1381
          %v1383 = vpop.f32.mrb[0].mxu0
          %v1384 = vpop.f32.mrb[0].mxu0
          %v1385 = vadd.f32 %v1289, %v1384
          %v1386 = vpop.f32.mrb[0].mxu0
          %1387 = vmatprep.mubr.bf16.mxu0 0
          %1388 = vmatmul.mubr.bf16.gmra.mrb[0].mxu0 %v1262
          %v1389 = vpop.f32.mrb[0].mxu0
          %v1390 = vadd.f32 %v1289, %v1389
          %v1391 = vpop.f32.mrb[0].mxu0
          %v1392 = vpop.f32.mrb[0].mxu0
          %v1393 = vadd.f32 %v1289, %v1392
          %v1394 = vpop.f32.mrb[0].mxu0
          %1395 = vmatprep.mubr.bf16.mxu0 0
          %1396 = vmatmul.mubr.bf16.gmra.mrb[0].mxu0 %v1263
          %v1397 = vpop.f32.mrb[0].mxu0
          %v1398 = vadd.f32 %v1289, %v1397
          %v1399 = vpop.f32.mrb[0].mxu0
          %v1400 = vpop.f32.mrb[0].mxu0
          %v1401 = vadd.f32 %v1289, %v1400
          %v1402 = vpop.f32.mrb[0].mxu0
          %1403 = vmatprep.mubr.bf16.mxu0 0
          %1404 = vmatmul.mubr.bf16.gmra.mrb[0].mxu0 %v1264
          %v1405 = vpop.f32.mrb[0].mxu0
          %v1406 = vadd.f32 %v1289, %v1405
          %v1407 = vpop.f32.mrb[0].mxu0
          %v1408 = vpop.f32.mrb[0].mxu0
          %v1409 = vadd.f32 %v1289, %v1408
          %v1410 = vpop.f32.mrb[0].mxu0
          %1411 = vmatprep.mubr.bf16.mxu0 0
          %1412 = vmatmul.mubr.bf16.gmra.mrb[0].mxu0 %v1265
          %v1413 = vpop.f32.mrb[0].mxu0
          %v1414 = vadd.f32 %v1289, %v1413
          %v1415 = vpop.f32.mrb[0].mxu0
          %v1416 = vpop.f32.mrb[0].mxu0
          %v1417 = vadd.f32 %v1289, %v1416
          %v1418 = vpop.f32.mrb[0].mxu0
          %1419 = vmatprep.mubr.bf16.mxu0 0
          %1420 = vmatmul.mubr.bf16.gmra.mrb[0].mxu0 %v1266
          %v1421 = vpop.f32.mrb[0].mxu0
          %v1422 = vadd.f32 %v1289, %v1421
          %v1423 = vpop.f32.mrb[0].mxu0
          %v1424 = vpop.f32.mrb[0].mxu0
          %v1425 = vadd.f32 %v1289, %v1424
          %v1426 = vpop.f32.mrb[0].mxu0
          %1427 = vmatprep.mubr.bf16.mxu0 0
          %1428 = vmatmul.mubr.bf16.gmra.mrb[0].mxu0 %v1267
          %v1429 = vpop.f32.mrb[0].mxu0
          %v1430 = vadd.f32 %v1289, %v1429
          %v1431 = vpop.f32.mrb[0].mxu0
          %v1432 = vpop.f32.mrb[0].mxu0
          %v1433 = vadd.f32 %v1289, %v1432
          %v1434 = vpop.f32.mrb[0].mxu0
          %1435 = vdwg.mxu0
          %v1436 = vmax.f32 %v1374, 0.0
          %v1437 = vmax.f32 %v1377, 0.0
          %v1438 = vmax.f32 %v1382, 0.0
          %v1439 = vmax.f32 %v1385, 0.0
          %v1440 = vmax.f32 %v1390, 0.0
          %v1441 = vmax.f32 %v1393, 0.0
          %v1442 = vmax.f32 %v1398, 0.0
          %v1443 = vmax.f32 %v1401, 0.0
          %v1444 = vmax.f32 %v1406, 0.0
          %v1445 = vmax.f32 %v1409, 0.0
          %v1446 = vmax.f32 %v1414, 0.0
          %v1447 = vmax.f32 %v1417, 0.0
          %v1448 = vmax.f32 %v1422, 0.0
          %v1449 = vmax.f32 %v1425, 0.0
          %v1450 = vmax.f32 %v1430, 0.0
          %v1451 = vmax.f32 %v1433, 0.0
          %v1452 = vpack.c.bf16 %v1437, %v1436
          %v1453 = vpack.c.bf16 %v1439, %v1438
          %v1454 = vpack.c.bf16 %v1441, %v1440
          %v1455 = vpack.c.bf16 %v1443, %v1442
          %v1456 = vpack.c.bf16 %v1445, %v1444
          %v1457 = vpack.c.bf16 %v1447, %v1446
          %v1458 = vpack.c.bf16 %v1449, %v1448
          %v1459 = vpack.c.bf16 %v1451, %v1450
          %v1460 = vld [vmem:[%s7] sm:$0xf]
          %v1461 = vld [vmem:[%s7 + $0x4] sm:$0xf]
          %v1462 = vld [vmem:[%s7 + $0x8] sm:$0xf]
          %v1463 = vld [vmem:[%s7 + $0xc] sm:$0xf]
          %v1464 = vld [vmem:[%s7 + $0x10] sm:$0xf]
          %v1465 = vld [vmem:[%s7 + $0x14] sm:$0xf]
          %v1466 = vld [vmem:[%s7 + $0x18] sm:$0xf]
          %v1467 = vld [vmem:[%s7 + $0x1c] sm:$0xf]
          %v1468 = vld [vmem:[%s7 + $0x20] sm:$0xf]
          %v1469 = vld [vmem:[%s7 + $0x24] sm:$0xf]
          %v1470 = vld [vmem:[%s7 + $0x28] sm:$0xf]
          %v1471 = vld [vmem:[%s7 + $0x2c] sm:$0xf]
          %v1472 = vld [vmem:[%s7 + $0x30] sm:$0xf]
          %v1473 = vld [vmem:[%s7 + $0x34] sm:$0xf]
          %v1474 = vld [vmem:[%s7 + $0x38] sm:$0xf]
          %v1475 = vld [vmem:[%s7 + $0x3c] sm:$0xf]
          %v1476 = vld [vmem:[%s8] sm:$0x1]
          %v1478 = vlaneseq
          %v1479 = vshrl.u32 %v1478, 7
          %v1480 = vsub.s32 0, %v1479
          %v1481 = vrot.slane %v1476, %v1480
          %v1499 = vunpack.c.l.b16 %v1460
          %v1500 = vunpack.c.l.b16 %v1461
          %v1501 = vunpack.c.l.b16 %v1462
          %v1502 = vunpack.c.l.b16 %v1463
          %v1503 = vunpack.c.l.b16 %v1464
          %v1504 = vunpack.c.l.b16 %v1465
          %v1505 = vunpack.c.l.b16 %v1466
          %v1506 = vunpack.c.l.b16 %v1467
          %v1507 = vunpack.c.l.b16 %v1468
          %v1508 = vunpack.c.l.b16 %v1469
          %v1509 = vunpack.c.l.b16 %v1470
          %v1510 = vunpack.c.l.b16 %v1471
          %v1511 = vunpack.c.l.b16 %v1472
          %v1512 = vunpack.c.l.b16 %v1473
          %v1513 = vunpack.c.l.b16 %v1474
          %v1514 = vunpack.c.l.b16 %v1475
          %v1515 = vpack.c.b16 %v1500, %v1499
          %v1516 = vpack.c.b16 %v1502, %v1501
          %v1517 = vpack.c.b16 %v1504, %v1503
          %v1518 = vpack.c.b16 %v1506, %v1505
          %v1519 = vpack.c.b16 %v1508, %v1507
          %v1520 = vpack.c.b16 %v1510, %v1509
          %v1521 = vpack.c.b16 %v1512, %v1511
          %v1522 = vpack.c.b16 %v1514, %v1513
          %1531 = vmatprep.subr.bf16.mxu0 0
          %1532 = vmatpush1.bf16.msra.mxu0 %v1515
          %1533 = vmatprep.subr.bf16.mxu0 0
          %1534 = vmatpush1.bf16.msra.mxu0 %v1516
          %1535 = vmatprep.subr.bf16.mxu0 0
          %1536 = vmatpush1.bf16.msra.mxu0 %v1517
          %1537 = vmatprep.subr.bf16.mxu0 0
          %1538 = vmatpush1.bf16.msra.mxu0 %v1518
          %1539 = vmatprep.subr.bf16.mxu0 0
          %1540 = vmatpush1.bf16.msra.mxu0 %v1519
          %1541 = vmatprep.subr.bf16.mxu0 0
          %1542 = vmatpush1.bf16.msra.mxu0 %v1520
          %1543 = vmatprep.subr.bf16.mxu0 0
          %1544 = vmatpush1.bf16.msra.mxu0 %v1521
          %1545 = vmatprep.subr.bf16.mxu0 0
          %1546 = vmatpush1.bf16.msra.mxu0 %v1522
          %1547 = vmatprep.subr.bf16.mxu0 0
          %1548 = vmatpush1.bf16.msra.mxu0 0
          %1549 = vmatprep.subr.bf16.mxu0 0
          %1550 = vmatpush1.bf16.msra.mxu0 0
          %1551 = vmatprep.subr.bf16.mxu0 0
          %1552 = vmatpush1.bf16.msra.mxu0 0
          %1553 = vmatprep.subr.bf16.mxu0 0
          %1554 = vmatpush1.bf16.msra.mxu0 0
          %1555 = vmatprep.subr.bf16.mxu0 0
          %1556 = vmatpush1.bf16.msra.mxu0 0
          %1557 = vmatprep.subr.bf16.mxu0 0
          %1558 = vmatpush1.bf16.msra.mxu0 0
          %1559 = vmatprep.subr.bf16.mxu0 0
          %1560 = vmatpush1.bf16.msra.mxu0 0
          %1561 = vmatprep.subr.bf16.mxu0 0
          %1562 = vmatpush1.bf16.msra.mxu0 0
          %1563 = vmatprep.mubr.bf16.mxu0 0
          %1564 = vmatmul.mubr.bf16.gmra.mrb[0].mxu0 %v1452
          %v1565 = vpop.f32.mrb[0].mxu0
          %v1566 = vadd.f32 %v1481, %v1565
          %v1567 = vpop.f32.mrb[0].mxu0
          %v1568 = vpop.f32.mrb[0].mxu0
          %v1569 = vadd.f32 %v1481, %v1568
          %v1570 = vpop.f32.mrb[0].mxu0
          %1571 = vmatprep.mubr.bf16.mxu0 0
          %1572 = vmatmul.mubr.bf16.gmra.mrb[0].mxu0 %v1453
          %v1573 = vpop.f32.mrb[0].mxu0
          %v1574 = vadd.f32 %v1481, %v1573
          %v1575 = vpop.f32.mrb[0].mxu0
          %v1576 = vpop.f32.mrb[0].mxu0
          %v1577 = vadd.f32 %v1481, %v1576
          %v1578 = vpop.f32.mrb[0].mxu0
          %1579 = vmatprep.mubr.bf16.mxu0 0
          %1580 = vmatmul.mubr.bf16.gmra.mrb[0].mxu0 %v1454
          %v1581 = vpop.f32.mrb[0].mxu0
          %v1582 = vadd.f32 %v1481, %v1581
          %v1583 = vpop.f32.mrb[0].mxu0
          %v1584 = vpop.f32.mrb[0].mxu0
          %v1585 = vadd.f32 %v1481, %v1584
          %v1586 = vpop.f32.mrb[0].mxu0
          %1587 = vmatprep.mubr.bf16.mxu0 0
          %1588 = vmatmul.mubr.bf16.gmra.mrb[0].mxu0 %v1455
          %v1589 = vpop.f32.mrb[0].mxu0
          %v1590 = vadd.f32 %v1481, %v1589
          %v1591 = vpop.f32.mrb[0].mxu0
          %v1592 = vpop.f32.mrb[0].mxu0
          %v1593 = vadd.f32 %v1481, %v1592
          %v1594 = vpop.f32.mrb[0].mxu0
          %1595 = vmatprep.mubr.bf16.mxu0 0
          %1596 = vmatmul.mubr.bf16.gmra.mrb[0].mxu0 %v1456
          %v1597 = vpop.f32.mrb[0].mxu0
          %v1598 = vadd.f32 %v1481, %v1597
          %v1599 = vpop.f32.mrb[0].mxu0
          %v1600 = vpop.f32.mrb[0].mxu0
          %v1601 = vadd.f32 %v1481, %v1600
          %v1602 = vpop.f32.mrb[0].mxu0
          %1603 = vmatprep.mubr.bf16.mxu0 0
          %1604 = vmatmul.mubr.bf16.gmra.mrb[0].mxu0 %v1457
          %v1605 = vpop.f32.mrb[0].mxu0
          %v1606 = vadd.f32 %v1481, %v1605
          %v1607 = vpop.f32.mrb[0].mxu0
          %v1608 = vpop.f32.mrb[0].mxu0
          %v1609 = vadd.f32 %v1481, %v1608
          %v1610 = vpop.f32.mrb[0].mxu0
          %1611 = vmatprep.mubr.bf16.mxu0 0
          %1612 = vmatmul.mubr.bf16.gmra.mrb[0].mxu0 %v1458
          %v1613 = vpop.f32.mrb[0].mxu0
          %v1614 = vadd.f32 %v1481, %v1613
          %v1615 = vpop.f32.mrb[0].mxu0
          %v1616 = vpop.f32.mrb[0].mxu0
          %v1617 = vadd.f32 %v1481, %v1616
          %v1618 = vpop.f32.mrb[0].mxu0
          %1619 = vmatprep.mubr.bf16.mxu0 0
          %1620 = vmatmul.mubr.bf16.gmra.mrb[0].mxu0 %v1459
          %v1621 = vpop.f32.mrb[0].mxu0
          %v1622 = vadd.f32 %v1481, %v1621
          %v1623 = vpop.f32.mrb[0].mxu0
          %v1624 = vpop.f32.mrb[0].mxu0
          %v1625 = vadd.f32 %v1481, %v1624
          %v1626 = vpop.f32.mrb[0].mxu0
          %1627 = vdwg.mxu0
          %1628 = vst [vmem:[%s476] sm:$0xff] %v1566
          %1629 = vst [vmem:[%s476 + $0x8] sm:$0xff] %v1569
          %1630 = vst [vmem:[%s476 + $0x10] sm:$0xff] %v1574
          %1631 = vst [vmem:[%s476 + $0x18] sm:$0xff] %v1577
          %1632 = vst [vmem:[%s476 + $0x20] sm:$0xff] %v1582
          %1633 = vst [vmem:[%s476 + $0x28] sm:$0xff] %v1585
          %1634 = vst [vmem:[%s476 + $0x30] sm:$0xff] %v1590
          %1635 = vst [vmem:[%s476 + $0x38] sm:$0xff] %v1593
          %1636 = vst [vmem:[%s476 + $0x40] sm:$0xff] %v1598
          %1637 = vst [vmem:[%s476 + $0x48] sm:$0xff] %v1601
          %1638 = vst [vmem:[%s476 + $0x50] sm:$0xff] %v1606
          %1639 = vst [vmem:[%s476 + $0x58] sm:$0xff] %v1609
          %1640 = vst [vmem:[%s476 + $0x60] sm:$0xff] %v1614
          %1641 = vst [vmem:[%s476 + $0x68] sm:$0xff] %v1617
          %1642 = vst [vmem:[%s476 + $0x70] sm:$0xff] %v1622
          %1643 = vst [vmem:[%s476 + $0x78] sm:$0xff] %v1625
        $region105: #{neuralnet_forward.1} parent=92 // pred_fallthru
          _
        %s1644 = smul.u32 16, %s24
        %p1645 = scmp.lt.s32.totalorder %s1644, 15
        %s1646 = scalar_select %p1645, %s1644, 15
        %s1647 = smul.addr %s1646, 8
        %s1648 = scalar_lea.vmem %s9, %s1647
        // Predicated region
        $region106: #{neuralnet_forward.1} parent=92 // pred_check
          %p1649 = pneg %p251
        $region107: #{neuralnet_forward.1} parent=92 // pred_check_branch
          %1651 = sbr.rel (%p1649) target = $region109
        $region108: #{neuralnet_forward.1} parent=92 // pred_region
          %s1652 = smul.u32 16, %s24
        $region109: #{neuralnet_forward.1} parent=92 // pred_fallthru
          _
        // Predicated region
        $region110: #{neuralnet_forward.1} parent=92 // pred_check
          %p1653 = pneg %p251
        $region111: #{neuralnet_forward.1} parent=92 // pred_check_branch
          %1655 = sbr.rel (%p1653) target = $region113
        $region112: #{neuralnet_forward.1} parent=92 // pred_region
          %s1656 = smul.u32 16, %s24
          %p1657 = scmp.lt.s32.totalorder %s1656, 15
          %s1658 = scalar_select %p1657, %s1656, 15
          %s1659 = smul.addr %s1658, 8
          %s1660 = scalar_lea.vmem %s9, %s1659
        $region113: #{neuralnet_forward.1} parent=92 // pred_fallthru
          _
      $region93: #{neuralnet_forward.1} parent=5 // pred_fallthru
        _
      %p1661 = scmp.le.s32.totalorder 2, %s15
      // Predicated region
      $region114: #{neuralnet_forward.1} parent=5 // pred_check
        %p1662 = pneg %p1661
      $region115: #{neuralnet_forward.1} parent=5 // pred_check_branch
        %1664 = sbr.rel (%p1662) target = $region117
      $region116: #{neuralnet_forward.1} parent=5 // pred_region
        %s1665 = ssub.s32 %s15, 2
      $region117: #{neuralnet_forward.1} parent=5 // pred_fallthru
        _
    $region6: #{neuralnet_forward.1} parent=1 // loop_footer
      %s19 = sadd.s32 1, %s15
    $region7: #{neuralnet_forward.1} parent=1 // loop_footer_branch
      %14 = sbr.rel target = $region3
    $region8: #{neuralnet_forward.1} parent=1 // loop_exit
      _

</llo_original>
